<compile_context>
chip_gen: v5e
topology: v5e:2x2
jax: 0.10.0
libtpu: 0.0.40
codegen_flags: <defaults>
</compile_context>

<pallas_src>
import jax
import jax.numpy as jnp
from jax.experimental import pallas as pl
from jax.experimental.pallas import tpu as pltpu

# architecture (from the PyTorch module)
#   encoder: 784 -> 256 -> 64 -> 20   (ReLU after each)
#   decoder:  20 ->  64 -> 256 -> 784 (ReLU, ReLU, Sigmoid)
LOGICAL_DIMS = [(784, 256), (256, 64), (64, 20), (20, 64), (64, 256), (256, 784)]
# lane-aligned padded dims (multiples of 128 where it matters)
PADDED_DIMS = [(896, 256), (256, 128), (128, 128), (128, 128), (128, 256), (256, 896)]
F_LOGICAL = 784
F_PADDED = 896            # 7 * 128
MAX_BATCH_TILE = 256      # one full MXU edge on v6e / v7x


def _round_up(n, m):
    return ((n + m - 1) // m) * m


def _pick_batch_tile(batch):
    """Sublane-aligned batch tile.

    <=256 rows: single tile (minimal padding).  257..512: two tiles so a
    2-TensorCore chip (v7x) can split the parallel axis.  Bigger: 256-row
    tiles (full MXU edge), which also yields >=3 grid tiles.
    """
    b8 = _round_up(max(batch, 1), 8)
    if b8 <= MAX_BATCH_TILE:
        return b8
    if b8 <= 2 * MAX_BATCH_TILE:
        return _round_up((b8 + 1) // 2, 8)
    return MAX_BATCH_TILE


def _ae_kernel(x_ref,
               w1, b1, w2, b2, w3, b3, w4, b4, w5, b5, w6, b6,
               o_ref):
    """Full encoder+decoder MLP on one (batch_tile, 896) tile."""

    def dense(h, w_ref, b_ref):
        # bf16 x bf16 matmul on the MXU, f32 accumulation, f32 bias add.
        return jnp.dot(h.astype(jnp.bfloat16), w_ref[...],
                       preferred_element_type=jnp.float32) + b_ref[...]

    h = x_ref[...]
    h = jnp.maximum(dense(h, w1, b1), 0.0)   # 896 -> 256
    h = jnp.maximum(dense(h, w2, b2), 0.0)   # 256 -> 128 (logical 64)
    h = jnp.maximum(dense(h, w3, b3), 0.0)   # 128 -> 128 (logical 20)
    h = jnp.maximum(dense(h, w4, b4), 0.0)   # 128 -> 128 (logical 64)
    h = jnp.maximum(dense(h, w5, b5), 0.0)   # 128 -> 256
    o_ref[...] = jax.nn.sigmoid(dense(h, w6, b6)).astype(o_ref.dtype)  # 256 -> 896


@jax.jit
def ae_forward(x, prepared_params):
    """x: (B, 1, 28, 28) float32 -> (B, 1, 28, 28) float32.

    `prepared_params` must come from `prepare_params` (padded, bf16 weights).
    """
    B = x.shape[0]
    batch_tile = _pick_batch_tile(B)
    B_pad = _round_up(B, batch_tile)
    n_tiles = B_pad // batch_tile

    x_flat = x.reshape(B, F_LOGICAL).astype(jnp.float32)
    x_flat = jnp.pad(x_flat, ((0, B_pad - B), (0, F_PADDED - F_LOGICAL)))

    x_spec = pl.BlockSpec((batch_tile, F_PADDED), lambda i: (i, 0))
    o_spec = pl.BlockSpec((batch_tile, F_PADDED), lambda i: (i, 0))

    # Weights/biases: one full-array block each, resident in VMEM for the
    # whole grid (index_map is constant, so they are fetched once).
    param_specs = []
    flat_params = []
    for (din_p, dout_p), (w, b) in zip(PADDED_DIMS, prepared_params):
        param_specs.append(pl.BlockSpec((din_p, dout_p), lambda i: (0, 0)))
        param_specs.append(pl.BlockSpec((1, dout_p), lambda i: (0, 0)))
        flat_params.append(w)
        flat_params.append(b)

    flops = 2 * B_pad * sum(di * do for di, do in PADDED_DIMS)
    transcendentals = B_pad * F_PADDED  # sigmoid on the final layer
    bytes_accessed = (
        x_flat.size * 4 + B_pad * F_PADDED * 4
        + sum(w.size * w.dtype.itemsize + b.size * b.dtype.itemsize
              for w, b in prepared_params))

    out = pl.pallas_call(
        _ae_kernel,
        out_shape=jax.ShapeDtypeStruct((B_pad, F_PADDED), jnp.float32),
        grid_spec=pltpu.PrefetchScalarGridSpec(
            num_scalar_prefetch=0,
            grid=(n_tiles,),
            in_specs=[x_spec] + param_specs,
            out_specs=o_spec,
        ),
        compiler_params=pltpu.CompilerParams(
            dimension_semantics=("parallel",),
        ),
        cost_estimate=pl.CostEstimate(
            flops=flops,
            transcendentals=transcendentals,
            bytes_accessed=bytes_accessed,
        ),
    )(x_flat, *flat_params)

    return out[:B, :F_LOGICAL].reshape(B, 1, 28, 28)


def init_params(key):
    """nn.Linear-style init: U(-1/sqrt(fan_in), 1/sqrt(fan_in)), logical shapes."""
    params = []
    for din, dout in LOGICAL_DIMS:
        key, kw, kb = jax.random.split(key, 3)
        bound = 1.0 / (din ** 0.5)
        w = jax.random.uniform(kw, (din, dout), jnp.float32, -bound, bound)
        b = jax.random.uniform(kb, (dout,), jnp.float32, -bound, bound)
        params.append((w, b))
    return params


def prepare_params(params):
    """Zero-pad every layer to lane-aligned shapes and cast weights to bf16."""
    prepared = []
    for (din, dout), (din_p, dout_p), (w, b) in zip(LOGICAL_DIMS, PADDED_DIMS, params):
        w_p = jnp.zeros((din_p, dout_p), jnp.float32).at[:din, :dout].set(w)
        b_p = jnp.zeros((1, dout_p), jnp.float32).at[0, :dout].set(b)
        prepared.append((w_p.astype(jnp.bfloat16), b_p))
    return prepared


def ae_reference(x, params):
    """Plain-JAX reference using the same bf16-weight / f32-accumulate math."""
    B = x.shape[0]
    h = x.reshape(B, F_LOGICAL).astype(jnp.float32)
    for idx, (w, b) in enumerate(params):
        y = jnp.dot(h.astype(jnp.bfloat16), w.astype(jnp.bfloat16),
                    preferred_element_type=jnp.float32) + b
        h = jnp.maximum(y, 0.0) if idx < len(params) - 1 else jax.nn.sigmoid(y)
    return h.reshape(B, 1, 28, 28)


if __name__ == "__main__":
    key = jax.random.PRNGKey(0)
    k_params, k_x1, k_x2 = jax.random.split(key, 3)

    params = init_params(k_params)
    prepared = prepare_params(params)

    # MNIST-like input: batch=2, channels=1, 28x28, values in [0, 1)
    x_small = jax.random.uniform(k_x1, (2, 1, 28, 28), jnp.float32)
    out_small = jax.block_until_ready(ae_forward(x_small, prepared))
    assert out_small.shape == (2, 1, 28, 28), out_small.shape
    assert out_small.dtype == jnp.float32, out_small.dtype
    ref_small = ae_reference(x_small, params)
    assert jnp.allclose(out_small, ref_small, atol=1e-3, rtol=1e-3), \
        float(jnp.max(jnp.abs(out_small - ref_small)))

    # Larger batch exercising the multi-tile (2 grid steps) path.
    x_big = jax.random.uniform(k_x2, (300, 1, 28, 28), jnp.float32)
    out_big = jax.block_until_ready(ae_forward(x_big, prepared))
    assert out_big.shape == (300, 1, 28, 28), out_big.shape
    ref_big = ae_reference(x_big, params)
    assert jnp.allclose(out_big, ref_big, atol=1e-3, rtol=1e-3), \
        float(jnp.max(jnp.abs(out_big - ref_big)))

    print("KERNEL_OK")
</pallas_src>

<mosaic_0001>
module attributes {stable_mosaic.version = 11 : i64} {
  func.func @_ae_kernel(%arg0: i32, %arg1: memref<8x896xf32, #tpu.memory_space<vmem>>, %arg2: memref<896x256xbf16, #tpu.memory_space<vmem>>, %arg3: memref<1x256xf32, #tpu.memory_space<vmem>>, %arg4: memref<256x128xbf16, #tpu.memory_space<vmem>>, %arg5: memref<1x128xf32, #tpu.memory_space<vmem>>, %arg6: memref<128x128xbf16, #tpu.memory_space<vmem>>, %arg7: memref<1x128xf32, #tpu.memory_space<vmem>>, %arg8: memref<128x128xbf16, #tpu.memory_space<vmem>>, %arg9: memref<1x128xf32, #tpu.memory_space<vmem>>, %arg10: memref<128x256xbf16, #tpu.memory_space<vmem>>, %arg11: memref<1x256xf32, #tpu.memory_space<vmem>>, %arg12: memref<256x896xbf16, #tpu.memory_space<vmem>>, %arg13: memref<1x896xf32, #tpu.memory_space<vmem>>, %arg14: memref<8x896xf32, #tpu.memory_space<vmem>>) attributes {dimension_semantics = [#tpu.dimension_semantics<parallel>], iteration_bounds = array<i64: 1>, scalar_prefetch = 0 : i64, scratch_operands = 0 : i64, tpu.core_type = #tpu.core_type<tc>, window_params = [{transform_indices = @transform_0, window_bounds = array<i64: 8, 896>}, {pipeline_mode = #tpu.pipeline_mode<synchronous>, transform_indices = @transform_1, window_bounds = array<i64: 896, 256>}, {pipeline_mode = #tpu.pipeline_mode<synchronous>, transform_indices = @transform_2, window_bounds = array<i64: 1, 256>}, {pipeline_mode = #tpu.pipeline_mode<synchronous>, transform_indices = @transform_3, window_bounds = array<i64: 256, 128>}, {pipeline_mode = #tpu.pipeline_mode<synchronous>, transform_indices = @transform_4, window_bounds = array<i64: 1, 128>}, {pipeline_mode = #tpu.pipeline_mode<synchronous>, transform_indices = @transform_5, window_bounds = array<i64: 128, 128>}, {pipeline_mode = #tpu.pipeline_mode<synchronous>, transform_indices = @transform_6, window_bounds = array<i64: 1, 128>}, {pipeline_mode = #tpu.pipeline_mode<synchronous>, transform_indices = @transform_7, window_bounds = array<i64: 128, 128>}, {pipeline_mode = #tpu.pipeline_mode<synchronous>, transform_indices = @transform_8, window_bounds = array<i64: 1, 128>}, {pipeline_mode = #tpu.pipeline_mode<synchronous>, transform_indices = @transform_9, window_bounds = array<i64: 128, 256>}, {pipeline_mode = #tpu.pipeline_mode<synchronous>, transform_indices = @transform_10, window_bounds = array<i64: 1, 256>}, {pipeline_mode = #tpu.pipeline_mode<synchronous>, transform_indices = @transform_11, window_bounds = array<i64: 256, 896>}, {pipeline_mode = #tpu.pipeline_mode<synchronous>, transform_indices = @transform_12, window_bounds = array<i64: 1, 896>}, {transform_indices = @transform_13, window_bounds = array<i64: 8, 896>}]} {
    %c0 = arith.constant 0 : index
    %c0_0 = arith.constant 0 : index
    %0 = vector.load %arg1[%c0, %c0_0] : memref<8x896xf32, #tpu.memory_space<vmem>>, vector<8x896xf32>
    %1 = arith.truncf %0 : vector<8x896xf32> to vector<8x896xbf16>
    %c0_1 = arith.constant 0 : index
    %c0_2 = arith.constant 0 : index
    %2 = vector.load %arg2[%c0_1, %c0_2] : memref<896x256xbf16, #tpu.memory_space<vmem>>, vector<896x256xbf16>
    %cst = arith.constant dense<0.000000e+00> : vector<8x256xf32>
    %3 = tpu.matmul %1, %2, %cst {dimension_numbers = #tpu.dot_dimension_numbers<[1], [0], [0], [1], [0, 0, 1, 1], [], []>} : vector<8x896xbf16>, vector<896x256xbf16>, vector<8x256xf32> -> vector<8x256xf32>
    %c0_3 = arith.constant 0 : index
    %c0_4 = arith.constant 0 : index
    %4 = vector.load %arg3[%c0_3, %c0_4] : memref<1x256xf32, #tpu.memory_space<vmem>>, vector<1x256xf32>
    %5 = vector.broadcast %4 : vector<1x256xf32> to vector<8x256xf32>
    %6 = arith.addf %3, %5 : vector<8x256xf32>
    %cst_5 = arith.constant 0.000000e+00 : f32
    %7 = vector.broadcast %cst_5 : f32 to vector<8x256xf32>
    %8 = arith.maximumf %6, %7 : vector<8x256xf32>
    %9 = arith.truncf %8 : vector<8x256xf32> to vector<8x256xbf16>
    %c0_6 = arith.constant 0 : index
    %c0_7 = arith.constant 0 : index
    %10 = vector.load %arg4[%c0_6, %c0_7] : memref<256x128xbf16, #tpu.memory_space<vmem>>, vector<256x128xbf16>
    %cst_8 = arith.constant dense<0.000000e+00> : vector<8x128xf32>
    %11 = tpu.matmul %9, %10, %cst_8 {dimension_numbers = #tpu.dot_dimension_numbers<[1], [0], [0], [1], [0, 0, 1, 1], [], []>} : vector<8x256xbf16>, vector<256x128xbf16>, vector<8x128xf32> -> vector<8x128xf32>
    %c0_9 = arith.constant 0 : index
    %c0_10 = arith.constant 0 : index
    %12 = vector.load %arg5[%c0_9, %c0_10] : memref<1x128xf32, #tpu.memory_space<vmem>>, vector<1x128xf32>
    %13 = vector.broadcast %12 : vector<1x128xf32> to vector<8x128xf32>
    %14 = arith.addf %11, %13 : vector<8x128xf32>
    %cst_11 = arith.constant 0.000000e+00 : f32
    %15 = vector.broadcast %cst_11 : f32 to vector<8x128xf32>
    %16 = arith.maximumf %14, %15 : vector<8x128xf32>
    %17 = arith.truncf %16 : vector<8x128xf32> to vector<8x128xbf16>
    %c0_12 = arith.constant 0 : index
    %c0_13 = arith.constant 0 : index
    %18 = vector.load %arg6[%c0_12, %c0_13] : memref<128x128xbf16, #tpu.memory_space<vmem>>, vector<128x128xbf16>
    %cst_14 = arith.constant dense<0.000000e+00> : vector<8x128xf32>
    %19 = tpu.matmul %17, %18, %cst_14 {dimension_numbers = #tpu.dot_dimension_numbers<[1], [0], [0], [1], [0, 0, 1, 1], [], []>} : vector<8x128xbf16>, vector<128x128xbf16>, vector<8x128xf32> -> vector<8x128xf32>
    %c0_15 = arith.constant 0 : index
    %c0_16 = arith.constant 0 : index
    %20 = vector.load %arg7[%c0_15, %c0_16] : memref<1x128xf32, #tpu.memory_space<vmem>>, vector<1x128xf32>
    %21 = vector.broadcast %20 : vector<1x128xf32> to vector<8x128xf32>
    %22 = arith.addf %19, %21 : vector<8x128xf32>
    %cst_17 = arith.constant 0.000000e+00 : f32
    %23 = vector.broadcast %cst_17 : f32 to vector<8x128xf32>
    %24 = arith.maximumf %22, %23 : vector<8x128xf32>
    %25 = arith.truncf %24 : vector<8x128xf32> to vector<8x128xbf16>
    %c0_18 = arith.constant 0 : index
    %c0_19 = arith.constant 0 : index
    %26 = vector.load %arg8[%c0_18, %c0_19] : memref<128x128xbf16, #tpu.memory_space<vmem>>, vector<128x128xbf16>
    %cst_20 = arith.constant dense<0.000000e+00> : vector<8x128xf32>
    %27 = tpu.matmul %25, %26, %cst_20 {dimension_numbers = #tpu.dot_dimension_numbers<[1], [0], [0], [1], [0, 0, 1, 1], [], []>} : vector<8x128xbf16>, vector<128x128xbf16>, vector<8x128xf32> -> vector<8x128xf32>
    %c0_21 = arith.constant 0 : index
    %c0_22 = arith.constant 0 : index
    %28 = vector.load %arg9[%c0_21, %c0_22] : memref<1x128xf32, #tpu.memory_space<vmem>>, vector<1x128xf32>
    %29 = vector.broadcast %28 : vector<1x128xf32> to vector<8x128xf32>
    %30 = arith.addf %27, %29 : vector<8x128xf32>
    %cst_23 = arith.constant 0.000000e+00 : f32
    %31 = vector.broadcast %cst_23 : f32 to vector<8x128xf32>
    %32 = arith.maximumf %30, %31 : vector<8x128xf32>
    %33 = arith.truncf %32 : vector<8x128xf32> to vector<8x128xbf16>
    %c0_24 = arith.constant 0 : index
    %c0_25 = arith.constant 0 : index
    %34 = vector.load %arg10[%c0_24, %c0_25] : memref<128x256xbf16, #tpu.memory_space<vmem>>, vector<128x256xbf16>
    %cst_26 = arith.constant dense<0.000000e+00> : vector<8x256xf32>
    %35 = tpu.matmul %33, %34, %cst_26 {dimension_numbers = #tpu.dot_dimension_numbers<[1], [0], [0], [1], [0, 0, 1, 1], [], []>} : vector<8x128xbf16>, vector<128x256xbf16>, vector<8x256xf32> -> vector<8x256xf32>
    %c0_27 = arith.constant 0 : index
    %c0_28 = arith.constant 0 : index
    %36 = vector.load %arg11[%c0_27, %c0_28] : memref<1x256xf32, #tpu.memory_space<vmem>>, vector<1x256xf32>
    %37 = vector.broadcast %36 : vector<1x256xf32> to vector<8x256xf32>
    %38 = arith.addf %35, %37 : vector<8x256xf32>
    %cst_29 = arith.constant 0.000000e+00 : f32
    %39 = vector.broadcast %cst_29 : f32 to vector<8x256xf32>
    %40 = arith.maximumf %38, %39 : vector<8x256xf32>
    %41 = arith.truncf %40 : vector<8x256xf32> to vector<8x256xbf16>
    %c0_30 = arith.constant 0 : index
    %c0_31 = arith.constant 0 : index
    %42 = vector.load %arg12[%c0_30, %c0_31] : memref<256x896xbf16, #tpu.memory_space<vmem>>, vector<256x896xbf16>
    %cst_32 = arith.constant dense<0.000000e+00> : vector<8x896xf32>
    %43 = tpu.matmul %41, %42, %cst_32 {dimension_numbers = #tpu.dot_dimension_numbers<[1], [0], [0], [1], [0, 0, 1, 1], [], []>} : vector<8x256xbf16>, vector<256x896xbf16>, vector<8x896xf32> -> vector<8x896xf32>
    %c0_33 = arith.constant 0 : index
    %c0_34 = arith.constant 0 : index
    %44 = vector.load %arg13[%c0_33, %c0_34] : memref<1x896xf32, #tpu.memory_space<vmem>>, vector<1x896xf32>
    %45 = vector.broadcast %44 : vector<1x896xf32> to vector<8x896xf32>
    %46 = arith.addf %43, %45 : vector<8x896xf32>
    %47 = arith.negf %46 : vector<8x896xf32>
    %48 = math.exp %47 : vector<8x896xf32>
    %cst_35 = arith.constant 1.000000e+00 : f32
    %49 = vector.broadcast %cst_35 : f32 to vector<8x896xf32>
    %50 = arith.addf %49, %48 : vector<8x896xf32>
    %51 = arith.divf %49, %50 : vector<8x896xf32>
    %c0_36 = arith.constant 0 : index
    %c0_37 = arith.constant 0 : index
    %52 = vector.load %arg14[%c0_36, %c0_37] : memref<8x896xf32, #tpu.memory_space<vmem>>, vector<8x896xf32>
    tpu.vector_store %arg14[%c0_36, %c0_37], %51 {strides = array<i32>} : memref<8x896xf32, #tpu.memory_space<vmem>>, vector<8x896xf32>,
    return
  }
  func.func @transform_0(%arg0: i32) -> (i32, i32) {
    %c0_i32 = arith.constant 0 : i32
    %c0_i32_0 = arith.constant 0 : i32
    return %arg0, %c0_i32 : i32, i32
  }
  func.func @transform_1(%arg0: i32) -> (i32, i32) {
    %c0_i32 = arith.constant 0 : i32
    %c0_i32_0 = arith.constant 0 : i32
    %c0_i32_1 = arith.constant 0 : i32
    return %c0_i32, %c0_i32_0 : i32, i32
  }
  func.func @transform_2(%arg0: i32) -> (i32, i32) {
    %c0_i32 = arith.constant 0 : i32
    %c0_i32_0 = arith.constant 0 : i32
    %c0_i32_1 = arith.constant 0 : i32
    return %c0_i32, %c0_i32_0 : i32, i32
  }
  func.func @transform_3(%arg0: i32) -> (i32, i32) {
    %c0_i32 = arith.constant 0 : i32
    %c0_i32_0 = arith.constant 0 : i32
    %c0_i32_1 = arith.constant 0 : i32
    return %c0_i32, %c0_i32_0 : i32, i32
  }
  func.func @transform_4(%arg0: i32) -> (i32, i32) {
    %c0_i32 = arith.constant 0 : i32
    %c0_i32_0 = arith.constant 0 : i32
    %c0_i32_1 = arith.constant 0 : i32
    return %c0_i32, %c0_i32_0 : i32, i32
  }
  func.func @transform_5(%arg0: i32) -> (i32, i32) {
    %c0_i32 = arith.constant 0 : i32
    %c0_i32_0 = arith.constant 0 : i32
    %c0_i32_1 = arith.constant 0 : i32
    return %c0_i32, %c0_i32_0 : i32, i32
  }
  func.func @transform_6(%arg0: i32) -> (i32, i32) {
    %c0_i32 = arith.constant 0 : i32
    %c0_i32_0 = arith.constant 0 : i32
    %c0_i32_1 = arith.constant 0 : i32
    return %c0_i32, %c0_i32_0 : i32, i32
  }
  func.func @transform_7(%arg0: i32) -> (i32, i32) {
    %c0_i32 = arith.constant 0 : i32
    %c0_i32_0 = arith.constant 0 : i32
    %c0_i32_1 = arith.constant 0 : i32
    return %c0_i32, %c0_i32_0 : i32, i32
  }
  func.func @transform_8(%arg0: i32) -> (i32, i32) {
    %c0_i32 = arith.constant 0 : i32
    %c0_i32_0 = arith.constant 0 : i32
    %c0_i32_1 = arith.constant 0 : i32
    return %c0_i32, %c0_i32_0 : i32, i32
  }
  func.func @transform_9(%arg0: i32) -> (i32, i32) {
    %c0_i32 = arith.constant 0 : i32
    %c0_i32_0 = arith.constant 0 : i32
    %c0_i32_1 = arith.constant 0 : i32
    return %c0_i32, %c0_i32_0 : i32, i32
  }
  func.func @transform_10(%arg0: i32) -> (i32, i32) {
    %c0_i32 = arith.constant 0 : i32
    %c0_i32_0 = arith.constant 0 : i32
    %c0_i32_1 = arith.constant 0 : i32
    return %c0_i32, %c0_i32_0 : i32, i32
  }
  func.func @transform_11(%arg0: i32) -> (i32, i32) {
    %c0_i32 = arith.constant 0 : i32
    %c0_i32_0 = arith.constant 0 : i32
    %c0_i32_1 = arith.constant 0 : i32
    return %c0_i32, %c0_i32_0 : i32, i32
  }
  func.func @transform_12(%arg0: i32) -> (i32, i32) {
    %c0_i32 = arith.constant 0 : i32
    %c0_i32_0 = arith.constant 0 : i32
    %c0_i32_1 = arith.constant 0 : i32
    return %c0_i32, %c0_i32_0 : i32, i32
  }
  func.func @transform_13(%arg0: i32) -> (i32, i32) {
    %c0_i32 = arith.constant 0 : i32
    %c0_i32_0 = arith.constant 0 : i32
    return %arg0, %c0_i32 : i32, i32
  }
}

</mosaic_0001>

<llo_original>
// kernel: ae_forward.1
$region0: #{ae_forward.1}
  #allocation0 [shape = 'u32[]', space=smem, size = 0x4, offset = 0x4, fixed_abs, tag = 'smem constant byte address 0x4 - core index']
  #allocation1 [shape = 'u32[72,128]{1,0:T(1,128)}', space=vmem, size = 0x9000, scoped, tag = 'internal scratch']
  %s0 = inlined_call_operand.vmem [shape: f32[8,896], index: 0, kind: input, shape index: {}]
  %s1 = inlined_call_operand.hbm [shape: bf16[896,256], index: 1, kind: input, shape index: {}]
  %s2 = inlined_call_operand.vmem [shape: f32[1,256], index: 2, kind: input, shape index: {}]
  %s3 = inlined_call_operand.vmem [shape: bf16[256,128], index: 3, kind: input, shape index: {}]
  %s4 = inlined_call_operand.vmem [shape: f32[1,128], index: 4, kind: input, shape index: {}]
  %s5 = inlined_call_operand.hbm [shape: bf16[128,128], index: 5, kind: input, shape index: {}]
  %s6 = inlined_call_operand.vmem [shape: f32[1,128], index: 6, kind: input, shape index: {}]
  %s7 = inlined_call_operand.hbm [shape: bf16[128,128], index: 7, kind: input, shape index: {}]
  %s8 = inlined_call_operand.vmem [shape: f32[1,128], index: 8, kind: input, shape index: {}]
  %s9 = inlined_call_operand.vmem [shape: bf16[128,256], index: 9, kind: input, shape index: {}]
  %s10 = inlined_call_operand.vmem [shape: f32[1,256], index: 10, kind: input, shape index: {}]
  %s11 = inlined_call_operand.hbm [shape: bf16[256,896], index: 11, kind: input, shape index: {}]
  %s12 = inlined_call_operand.vmem [shape: f32[1,896], index: 12, kind: input, shape index: {}]
  %s13 = inlined_call_operand.vmem [shape: f32[8,896], index: 13, kind: output, shape index: {}]
  %s14 = sld [smem:[#allocation0]]
  $region78: #{ae_forward.1} parent=0
    _
  %s16 = ssub.s32 1, %s14
  %s17 = scalar_select 0, %s16, %s14
  $region1: #{ae_forward.1} parent=0
    #allocation2 [shape = 'u8[458752]{0}', space=vmem, size = 0x70000, scoped, tag = 'input window, operand 1, single buffered']
    #allocation3 [shape = 's32[1]{0}', space=sflag, size = 0x4, scoped, tag = 'scoped memory for ae_forward.1']
    #allocation4 [shape = 'u8[32768]{0}', space=vmem, size = 0x8000, scoped, tag = 'input window, operand 5, single buffered']
    #allocation5 [shape = 's32[1]{0}', space=sflag, size = 0x4, scoped, tag = 'scoped memory for ae_forward.1']
    #allocation6 [shape = 'u8[32768]{0}', space=vmem, size = 0x8000, scoped, tag = 'input window, operand 7, single buffered']
    #allocation7 [shape = 'u8[458752]{0}', space=vmem, size = 0x70000, scoped, tag = 'input window, operand 11, single buffered']
    #allocation8 [shape = 's32[1]{0}', space=sflag, size = 0x4, scoped, tag = 'scoped memory for ae_forward.1']
    %18 = vsyncpa [#allocation3], 0
    %19 = vsyncpa [#allocation5], 0
    %20 = vsyncpa [#allocation8], 0
    // Predicated region
    $region2: #{ae_forward.1} parent=1 // pred_check
      _
    $region3: #{ae_forward.1} parent=1 // pred_check_branch
      %22 = sbr.rel (0) target = $region5
    $region4: #{ae_forward.1} parent=1 // pred_region
      _
    $region5: #{ae_forward.1} parent=1 // pred_fallthru
      _
    // Predicated region
    $region6: #{ae_forward.1} parent=1 // pred_check
      _
    $region7: #{ae_forward.1} parent=1 // pred_check_branch
      %24 = sbr.rel (0) target = $region9
    $region8: #{ae_forward.1} parent=1 // pred_region
      %26 = vsyncadd [#allocation3], 0
      %s27 = sshll.u32 %s1, 4
      %s28 = int_to_ptr.hbm [resolvable:$true] %s27
      %s29 = sshll.u32 [#allocation2], 4
      %s30 = int_to_ptr.vmem [resolvable:$true] %s29
      %35 = dma.hbm_to_vmem [thread:$0]  %s28, 14336, %s30, [#allocation3], 128, 128, 8
    $region9: #{ae_forward.1} parent=1 // pred_fallthru
      _
    // Predicated region
    $region10: #{ae_forward.1} parent=1 // pred_check
      _
    $region11: #{ae_forward.1} parent=1 // pred_check_branch
      %37 = sbr.rel (0) target = $region13
    $region12: #{ae_forward.1} parent=1 // pred_region
      _
    $region13: #{ae_forward.1} parent=1 // pred_fallthru
      _
    // Predicated region
    $region14: #{ae_forward.1} parent=1 // pred_check
      _
    $region15: #{ae_forward.1} parent=1 // pred_check_branch
      %39 = sbr.rel (0) target = $region17
    $region16: #{ae_forward.1} parent=1 // pred_region
      _
    $region17: #{ae_forward.1} parent=1 // pred_fallthru
      _
    // Predicated region
    $region18: #{ae_forward.1} parent=1 // pred_check
      _
    $region19: #{ae_forward.1} parent=1 // pred_check_branch
      %41 = sbr.rel (0) target = $region21
    $region20: #{ae_forward.1} parent=1 // pred_region
      _
    $region21: #{ae_forward.1} parent=1 // pred_fallthru
      _
    // Predicated region
    $region22: #{ae_forward.1} parent=1 // pred_check
      _
    $region23: #{ae_forward.1} parent=1 // pred_check_branch
      %43 = sbr.rel (0) target = $region25
    $region24: #{ae_forward.1} parent=1 // pred_region
      %45 = vsyncadd [#allocation5], 0
      %s46 = sshll.u32 %s5, 4
      %s47 = int_to_ptr.hbm [resolvable:$true] %s46
      %s48 = sshll.u32 [#allocation4], 4
      %s49 = int_to_ptr.vmem [resolvable:$true] %s48
      %54 = dma.hbm_to_vmem [thread:$0]  %s47, 1024, %s49, [#allocation5], 64, 64, 4
    $region25: #{ae_forward.1} parent=1 // pred_fallthru
      _
    // Predicated region
    $region26: #{ae_forward.1} parent=1 // pred_check
      _
    $region27: #{ae_forward.1} parent=1 // pred_check_branch
      %56 = sbr.rel (0) target = $region29
    $region28: #{ae_forward.1} parent=1 // pred_region
      _
    $region29: #{ae_forward.1} parent=1 // pred_fallthru
      _
    // Predicated region
    $region30: #{ae_forward.1} parent=1 // pred_check
      _
    $region31: #{ae_forward.1} parent=1 // pred_check_branch
      %58 = sbr.rel (0) target = $region33
    $region32: #{ae_forward.1} parent=1 // pred_region
      %60 = vsyncadd [#allocation5], 0
      %s61 = sshll.u32 %s7, 4
      %s62 = int_to_ptr.hbm [resolvable:$true] %s61
      %s63 = sshll.u32 [#allocation6], 4
      %s64 = int_to_ptr.vmem [resolvable:$true] %s63
      %69 = dma.hbm_to_vmem [thread:$0]  %s62, 1024, %s64, [#allocation5], 64, 64, 4
    $region33: #{ae_forward.1} parent=1 // pred_fallthru
      _
    // Predicated region
    $region34: #{ae_forward.1} parent=1 // pred_check
      _
    $region35: #{ae_forward.1} parent=1 // pred_check_branch
      %71 = sbr.rel (0) target = $region37
    $region36: #{ae_forward.1} parent=1 // pred_region
      _
    $region37: #{ae_forward.1} parent=1 // pred_fallthru
      _
    // Predicated region
    $region38: #{ae_forward.1} parent=1 // pred_check
      _
    $region39: #{ae_forward.1} parent=1 // pred_check_branch
      %73 = sbr.rel (0) target = $region41
    $region40: #{ae_forward.1} parent=1 // pred_region
      _
    $region41: #{ae_forward.1} parent=1 // pred_fallthru
      _
    // Predicated region
    $region42: #{ae_forward.1} parent=1 // pred_check
      _
    $region43: #{ae_forward.1} parent=1 // pred_check_branch
      %75 = sbr.rel (0) target = $region45
    $region44: #{ae_forward.1} parent=1 // pred_region
      _
    $region45: #{ae_forward.1} parent=1 // pred_fallthru
      _
    // Predicated region
    $region46: #{ae_forward.1} parent=1 // pred_check
      _
    $region47: #{ae_forward.1} parent=1 // pred_check_branch
      %77 = sbr.rel (0) target = $region49
    $region48: #{ae_forward.1} parent=1 // pred_region
      %79 = vsyncadd [#allocation8], 0
      %s80 = sshll.u32 %s11, 4
      %s81 = int_to_ptr.hbm [resolvable:$true] %s80
      %s82 = sshll.u32 [#allocation7], 4
      %s83 = int_to_ptr.vmem [resolvable:$true] %s82
      %88 = dma.hbm_to_vmem [thread:$0]  %s81, 14336, %s83, [#allocation8], 448, 448, 28
    $region49: #{ae_forward.1} parent=1 // pred_fallthru
      _
    // Predicated region
    $region50: #{ae_forward.1} parent=1 // pred_check
      _
    $region51: #{ae_forward.1} parent=1 // pred_check_branch
      %90 = sbr.rel (0) target = $region53
    $region52: #{ae_forward.1} parent=1 // pred_region
      _
    $region53: #{ae_forward.1} parent=1 // pred_fallthru
      _
    // Predicated region
    $region54: #{ae_forward.1} parent=1 // pred_check
      _
    $region55: #{ae_forward.1} parent=1 // pred_check_branch
      %92 = sbr.rel (0) target = $region57
    $region56: #{ae_forward.1} parent=1 // pred_region
      %94 = dma.done [#allocation3], 14336
    $region57: #{ae_forward.1} parent=1 // pred_fallthru
      _
    // Predicated region
    $region58: #{ae_forward.1} parent=1 // pred_check
      _
    $region59: #{ae_forward.1} parent=1 // pred_check_branch
      %96 = sbr.rel (0) target = $region61
    $region60: #{ae_forward.1} parent=1 // pred_region
      %98 = dma.done [#allocation5], 1024
    $region61: #{ae_forward.1} parent=1 // pred_fallthru
      _
    // Predicated region
    $region62: #{ae_forward.1} parent=1 // pred_check
      _
    $region63: #{ae_forward.1} parent=1 // pred_check_branch
      %100 = sbr.rel (0) target = $region65
    $region64: #{ae_forward.1} parent=1 // pred_region
      %102 = dma.done [#allocation5], 1024
    $region65: #{ae_forward.1} parent=1 // pred_fallthru
      _
    // Predicated region
    $region66: #{ae_forward.1} parent=1 // pred_check
      _
    $region67: #{ae_forward.1} parent=1 // pred_check_branch
      %104 = sbr.rel (0) target = $region69
    $region68: #{ae_forward.1} parent=1 // pred_region
      %106 = dma.done [#allocation8], 14336
    $region69: #{ae_forward.1} parent=1 // pred_fallthru
      _
    %v107 = vld [vmem:[%s0] sm:$0xff]
    %v108 = vld [vmem:[%s0 + $0x8] sm:$0xff]
    %v109 = vld [vmem:[%s0 + $0x10] sm:$0xff]
    %v110 = vld [vmem:[%s0 + $0x18] sm:$0xff]
    %v111 = vld [vmem:[%s0 + $0x20] sm:$0xff]
    %v112 = vld [vmem:[%s0 + $0x28] sm:$0xff]
    %v113 = vld [vmem:[%s0 + $0x30] sm:$0xff]
    %v114 = vpack.c.bf16 %v107, %v107
    %v115 = vpack.c.bf16 %v108, %v108
    %v116 = vpack.c.bf16 %v109, %v109
    %v117 = vpack.c.bf16 %v110, %v110
    %v118 = vpack.c.bf16 %v111, %v111
    %v119 = vpack.c.bf16 %v112, %v112
    %v120 = vpack.c.bf16 %v113, %v113
    %v121 = vld [vmem:[#allocation2] sm:$0xff]
    %v122 = vld [vmem:[#allocation2 + $0x8] sm:$0xff]
    %v123 = vld [vmem:[#allocation2 + $0x10] sm:$0xff]
    %v124 = vld [vmem:[#allocation2 + $0x18] sm:$0xff]
    %v125 = vld [vmem:[#allocation2 + $0x20] sm:$0xff]
    %v126 = vld [vmem:[#allocation2 + $0x28] sm:$0xff]
    %v127 = vld [vmem:[#allocation2 + $0x30] sm:$0xff]
    %v128 = vld [vmem:[#allocation2 + $0x38] sm:$0xff]
    %v129 = vld [vmem:[#allocation2 + $0x40] sm:$0xff]
    %v130 = vld [vmem:[#allocation2 + $0x48] sm:$0xff]
    %v131 = vld [vmem:[#allocation2 + $0x50] sm:$0xff]
    %v132 = vld [vmem:[#allocation2 + $0x58] sm:$0xff]
    %v133 = vld [vmem:[#allocation2 + $0x60] sm:$0xff]
    %v134 = vld [vmem:[#allocation2 + $0x68] sm:$0xff]
    %v135 = vld [vmem:[#allocation2 + $0x70] sm:$0xff]
    %v136 = vld [vmem:[#allocation2 + $0x78] sm:$0xff]
    %v137 = vld [vmem:[#allocation2 + $0x80] sm:$0xff]
    %v138 = vld [vmem:[#allocation2 + $0x88] sm:$0xff]
    %v139 = vld [vmem:[#allocation2 + $0x90] sm:$0xff]
    %v140 = vld [vmem:[#allocation2 + $0x98] sm:$0xff]
    %v141 = vld [vmem:[#allocation2 + $0xa0] sm:$0xff]
    %v142 = vld [vmem:[#allocation2 + $0xa8] sm:$0xff]
    %v143 = vld [vmem:[#allocation2 + $0xb0] sm:$0xff]
    %v144 = vld [vmem:[#allocation2 + $0xb8] sm:$0xff]
    %v145 = vld [vmem:[#allocation2 + $0xc0] sm:$0xff]
    %v146 = vld [vmem:[#allocation2 + $0xc8] sm:$0xff]
    %v147 = vld [vmem:[#allocation2 + $0xd0] sm:$0xff]
    %v148 = vld [vmem:[#allocation2 + $0xd8] sm:$0xff]
    %v149 = vld [vmem:[#allocation2 + $0xe0] sm:$0xff]
    %v150 = vld [vmem:[#allocation2 + $0xe8] sm:$0xff]
    %v151 = vld [vmem:[#allocation2 + $0xf0] sm:$0xff]
    %v152 = vld [vmem:[#allocation2 + $0xf8] sm:$0xff]
    %v153 = vld [vmem:[#allocation2 + $0x100] sm:$0xff]
    %v154 = vld [vmem:[#allocation2 + $0x108] sm:$0xff]
    %v155 = vld [vmem:[#allocation2 + $0x110] sm:$0xff]
    %v156 = vld [vmem:[#allocation2 + $0x118] sm:$0xff]
    %v157 = vld [vmem:[#allocation2 + $0x120] sm:$0xff]
    %v158 = vld [vmem:[#allocation2 + $0x128] sm:$0xff]
    %v159 = vld [vmem:[#allocation2 + $0x130] sm:$0xff]
    %v160 = vld [vmem:[#allocation2 + $0x138] sm:$0xff]
    %v161 = vld [vmem:[#allocation2 + $0x140] sm:$0xff]
    %v162 = vld [vmem:[#allocation2 + $0x148] sm:$0xff]
    %v163 = vld [vmem:[#allocation2 + $0x150] sm:$0xff]
    %v164 = vld [vmem:[#allocation2 + $0x158] sm:$0xff]
    %v165 = vld [vmem:[#allocation2 + $0x160] sm:$0xff]
    %v166 = vld [vmem:[#allocation2 + $0x168] sm:$0xff]
    %v167 = vld [vmem:[#allocation2 + $0x170] sm:$0xff]
    %v168 = vld [vmem:[#allocation2 + $0x178] sm:$0xff]
    %v169 = vld [vmem:[#allocation2 + $0x180] sm:$0xff]
    %v170 = vld [vmem:[#allocation2 + $0x188] sm:$0xff]
    %v171 = vld [vmem:[#allocation2 + $0x190] sm:$0xff]
    %v172 = vld [vmem:[#allocation2 + $0x198] sm:$0xff]
    %v173 = vld [vmem:[#allocation2 + $0x1a0] sm:$0xff]
    %v174 = vld [vmem:[#allocation2 + $0x1a8] sm:$0xff]
    %v175 = vld [vmem:[#allocation2 + $0x1b0] sm:$0xff]
    %v176 = vld [vmem:[#allocation2 + $0x1b8] sm:$0xff]
    %v177 = vld [vmem:[#allocation2 + $0x1c0] sm:$0xff]
    %v178 = vld [vmem:[#allocation2 + $0x1c8] sm:$0xff]
    %v179 = vld [vmem:[#allocation2 + $0x1d0] sm:$0xff]
    %v180 = vld [vmem:[#allocation2 + $0x1d8] sm:$0xff]
    %v181 = vld [vmem:[#allocation2 + $0x1e0] sm:$0xff]
    %v182 = vld [vmem:[#allocation2 + $0x1e8] sm:$0xff]
    %v183 = vld [vmem:[#allocation2 + $0x1f0] sm:$0xff]
    %v184 = vld [vmem:[#allocation2 + $0x1f8] sm:$0xff]
    %v185 = vld [vmem:[#allocation2 + $0x200] sm:$0xff]
    %v186 = vld [vmem:[#allocation2 + $0x208] sm:$0xff]
    %v187 = vld [vmem:[#allocation2 + $0x210] sm:$0xff]
    %v188 = vld [vmem:[#allocation2 + $0x218] sm:$0xff]
    %v189 = vld [vmem:[#allocation2 + $0x220] sm:$0xff]
    %v190 = vld [vmem:[#allocation2 + $0x228] sm:$0xff]
    %v191 = vld [vmem:[#allocation2 + $0x230] sm:$0xff]
    %v192 = vld [vmem:[#allocation2 + $0x238] sm:$0xff]
    %v193 = vld [vmem:[#allocation2 + $0x240] sm:$0xff]
    %v194 = vld [vmem:[#allocation2 + $0x248] sm:$0xff]
    %v195 = vld [vmem:[#allocation2 + $0x250] sm:$0xff]
    %v196 = vld [vmem:[#allocation2 + $0x258] sm:$0xff]
    %v197 = vld [vmem:[#allocation2 + $0x260] sm:$0xff]
    %v198 = vld [vmem:[#allocation2 + $0x268] sm:$0xff]
    %v199 = vld [vmem:[#allocation2 + $0x270] sm:$0xff]
    %v200 = vld [vmem:[#allocation2 + $0x278] sm:$0xff]
    %v201 = vld [vmem:[#allocation2 + $0x280] sm:$0xff]
    %v202 = vld [vmem:[#allocation2 + $0x288] sm:$0xff]
    %v203 = vld [vmem:[#allocation2 + $0x290] sm:$0xff]
    %v204 = vld [vmem:[#allocation2 + $0x298] sm:$0xff]
    %v205 = vld [vmem:[#allocation2 + $0x2a0] sm:$0xff]
    %v206 = vld [vmem:[#allocation2 + $0x2a8] sm:$0xff]
    %v207 = vld [vmem:[#allocation2 + $0x2b0] sm:$0xff]
    %v208 = vld [vmem:[#allocation2 + $0x2b8] sm:$0xff]
    %v209 = vld [vmem:[#allocation2 + $0x2c0] sm:$0xff]
    %v210 = vld [vmem:[#allocation2 + $0x2c8] sm:$0xff]
    %v211 = vld [vmem:[#allocation2 + $0x2d0] sm:$0xff]
    %v212 = vld [vmem:[#allocation2 + $0x2d8] sm:$0xff]
    %v213 = vld [vmem:[#allocation2 + $0x2e0] sm:$0xff]
    %v214 = vld [vmem:[#allocation2 + $0x2e8] sm:$0xff]
    %v215 = vld [vmem:[#allocation2 + $0x2f0] sm:$0xff]
    %v216 = vld [vmem:[#allocation2 + $0x2f8] sm:$0xff]
    %v217 = vld [vmem:[#allocation2 + $0x300] sm:$0xff]
    %v218 = vld [vmem:[#allocation2 + $0x308] sm:$0xff]
    %v219 = vld [vmem:[#allocation2 + $0x310] sm:$0xff]
    %v220 = vld [vmem:[#allocation2 + $0x318] sm:$0xff]
    %v221 = vld [vmem:[#allocation2 + $0x320] sm:$0xff]
    %v222 = vld [vmem:[#allocation2 + $0x328] sm:$0xff]
    %v223 = vld [vmem:[#allocation2 + $0x330] sm:$0xff]
    %v224 = vld [vmem:[#allocation2 + $0x338] sm:$0xff]
    %v225 = vld [vmem:[#allocation2 + $0x340] sm:$0xff]
    %v226 = vld [vmem:[#allocation2 + $0x348] sm:$0xff]
    %v227 = vld [vmem:[#allocation2 + $0x350] sm:$0xff]
    %v228 = vld [vmem:[#allocation2 + $0x358] sm:$0xff]
    %v229 = vld [vmem:[#allocation2 + $0x360] sm:$0xff]
    %v230 = vld [vmem:[#allocation2 + $0x368] sm:$0xff]
    %v231 = vld [vmem:[#allocation2 + $0x370] sm:$0xff]
    %v232 = vld [vmem:[#allocation2 + $0x378] sm:$0xff]
    %v233 = vld [vmem:[%s2] sm:$0x3]
    %v235 = vperm.slane %v233, 0
    %v236 = vperm.slane %v233, 1
    %v351 = vunpack.c.l.b16 %v121
    %v352 = vunpack.c.h.b16 %v121
    %v353 = vunpack.c.l.b16 %v122
    %v354 = vunpack.c.h.b16 %v122
    %v355 = vunpack.c.l.b16 %v123
    %v356 = vunpack.c.h.b16 %v123
    %v357 = vunpack.c.l.b16 %v124
    %v358 = vunpack.c.h.b16 %v124
    %v359 = vunpack.c.l.b16 %v125
    %v360 = vunpack.c.h.b16 %v125
    %v361 = vunpack.c.l.b16 %v126
    %v362 = vunpack.c.h.b16 %v126
    %v363 = vunpack.c.l.b16 %v127
    %v364 = vunpack.c.h.b16 %v127
    %v365 = vunpack.c.l.b16 %v128
    %v366 = vunpack.c.h.b16 %v128
    %v367 = vunpack.c.l.b16 %v129
    %v368 = vunpack.c.h.b16 %v129
    %v369 = vunpack.c.l.b16 %v130
    %v370 = vunpack.c.h.b16 %v130
    %v371 = vunpack.c.l.b16 %v131
    %v372 = vunpack.c.h.b16 %v131
    %v373 = vunpack.c.l.b16 %v132
    %v374 = vunpack.c.h.b16 %v132
    %v375 = vunpack.c.l.b16 %v133
    %v376 = vunpack.c.h.b16 %v133
    %v377 = vunpack.c.l.b16 %v134
    %v378 = vunpack.c.h.b16 %v134
    %v379 = vunpack.c.l.b16 %v135
    %v380 = vunpack.c.h.b16 %v135
    %v381 = vunpack.c.l.b16 %v136
    %v382 = vunpack.c.h.b16 %v136
    %v383 = vunpack.c.l.b16 %v137
    %v384 = vunpack.c.h.b16 %v137
    %v385 = vunpack.c.l.b16 %v138
    %v386 = vunpack.c.h.b16 %v138
    %v387 = vunpack.c.l.b16 %v139
    %v388 = vunpack.c.h.b16 %v139
    %v389 = vunpack.c.l.b16 %v140
    %v390 = vunpack.c.h.b16 %v140
    %v391 = vunpack.c.l.b16 %v141
    %v392 = vunpack.c.h.b16 %v141
    %v393 = vunpack.c.l.b16 %v142
    %v394 = vunpack.c.h.b16 %v142
    %v395 = vunpack.c.l.b16 %v143
    %v396 = vunpack.c.h.b16 %v143
    %v397 = vunpack.c.l.b16 %v144
    %v398 = vunpack.c.h.b16 %v144
    %v399 = vunpack.c.l.b16 %v145
    %v400 = vunpack.c.h.b16 %v145
    %v401 = vunpack.c.l.b16 %v146
    %v402 = vunpack.c.h.b16 %v146
    %v403 = vunpack.c.l.b16 %v147
    %v404 = vunpack.c.h.b16 %v147
    %v405 = vunpack.c.l.b16 %v148
    %v406 = vunpack.c.h.b16 %v148
    %v407 = vunpack.c.l.b16 %v149
    %v408 = vunpack.c.h.b16 %v149
    %v409 = vunpack.c.l.b16 %v150
    %v410 = vunpack.c.h.b16 %v150
    %v411 = vunpack.c.l.b16 %v151
    %v412 = vunpack.c.h.b16 %v151
    %v413 = vunpack.c.l.b16 %v152
    %v414 = vunpack.c.h.b16 %v152
    %v415 = vunpack.c.l.b16 %v153
    %v416 = vunpack.c.h.b16 %v153
    %v417 = vunpack.c.l.b16 %v154
    %v418 = vunpack.c.h.b16 %v154
    %v419 = vunpack.c.l.b16 %v155
    %v420 = vunpack.c.h.b16 %v155
    %v421 = vunpack.c.l.b16 %v156
    %v422 = vunpack.c.h.b16 %v156
    %v423 = vunpack.c.l.b16 %v157
    %v424 = vunpack.c.h.b16 %v157
    %v425 = vunpack.c.l.b16 %v158
    %v426 = vunpack.c.h.b16 %v158
    %v427 = vunpack.c.l.b16 %v159
    %v428 = vunpack.c.h.b16 %v159
    %v429 = vunpack.c.l.b16 %v160
    %v430 = vunpack.c.h.b16 %v160
    %v431 = vunpack.c.l.b16 %v161
    %v432 = vunpack.c.h.b16 %v161
    %v433 = vunpack.c.l.b16 %v162
    %v434 = vunpack.c.h.b16 %v162
    %v435 = vunpack.c.l.b16 %v163
    %v436 = vunpack.c.h.b16 %v163
    %v437 = vunpack.c.l.b16 %v164
    %v438 = vunpack.c.h.b16 %v164
    %v439 = vunpack.c.l.b16 %v165
    %v440 = vunpack.c.h.b16 %v165
    %v441 = vunpack.c.l.b16 %v166
    %v442 = vunpack.c.h.b16 %v166
    %v443 = vunpack.c.l.b16 %v167
    %v444 = vunpack.c.h.b16 %v167
    %v445 = vunpack.c.l.b16 %v168
    %v446 = vunpack.c.h.b16 %v168
    %v447 = vunpack.c.l.b16 %v169
    %v448 = vunpack.c.h.b16 %v169
    %v449 = vunpack.c.l.b16 %v170
    %v450 = vunpack.c.h.b16 %v170
    %v451 = vunpack.c.l.b16 %v171
    %v452 = vunpack.c.h.b16 %v171
    %v453 = vunpack.c.l.b16 %v172
    %v454 = vunpack.c.h.b16 %v172
    %v455 = vunpack.c.l.b16 %v173
    %v456 = vunpack.c.h.b16 %v173
    %v457 = vunpack.c.l.b16 %v174
    %v458 = vunpack.c.h.b16 %v174
    %v459 = vunpack.c.l.b16 %v175
    %v460 = vunpack.c.h.b16 %v175
    %v461 = vunpack.c.l.b16 %v176
    %v462 = vunpack.c.h.b16 %v176
    %v463 = vunpack.c.l.b16 %v177
    %v464 = vunpack.c.h.b16 %v177
    %v465 = vunpack.c.l.b16 %v178
    %v466 = vunpack.c.h.b16 %v178
    %v467 = vunpack.c.l.b16 %v179
    %v468 = vunpack.c.h.b16 %v179
    %v469 = vunpack.c.l.b16 %v180
    %v470 = vunpack.c.h.b16 %v180
    %v471 = vunpack.c.l.b16 %v181
    %v472 = vunpack.c.h.b16 %v181
    %v473 = vunpack.c.l.b16 %v182
    %v474 = vunpack.c.h.b16 %v182
    %v475 = vunpack.c.l.b16 %v183
    %v476 = vunpack.c.h.b16 %v183
    %v477 = vunpack.c.l.b16 %v184
    %v478 = vunpack.c.h.b16 %v184
    %v479 = vunpack.c.l.b16 %v185
    %v480 = vunpack.c.h.b16 %v185
    %v481 = vunpack.c.l.b16 %v186
    %v482 = vunpack.c.h.b16 %v186
    %v483 = vunpack.c.l.b16 %v187
    %v484 = vunpack.c.h.b16 %v187
    %v485 = vunpack.c.l.b16 %v188
    %v486 = vunpack.c.h.b16 %v188
    %v487 = vunpack.c.l.b16 %v189
    %v488 = vunpack.c.h.b16 %v189
    %v489 = vunpack.c.l.b16 %v190
    %v490 = vunpack.c.h.b16 %v190
    %v491 = vunpack.c.l.b16 %v191
    %v492 = vunpack.c.h.b16 %v191
    %v493 = vunpack.c.l.b16 %v192
    %v494 = vunpack.c.h.b16 %v192
    %v495 = vunpack.c.l.b16 %v193
    %v496 = vunpack.c.h.b16 %v193
    %v497 = vunpack.c.l.b16 %v194
    %v498 = vunpack.c.h.b16 %v194
    %v499 = vunpack.c.l.b16 %v195
    %v500 = vunpack.c.h.b16 %v195
    %v501 = vunpack.c.l.b16 %v196
    %v502 = vunpack.c.h.b16 %v196
    %v503 = vunpack.c.l.b16 %v197
    %v504 = vunpack.c.h.b16 %v197
    %v505 = vunpack.c.l.b16 %v198
    %v506 = vunpack.c.h.b16 %v198
    %v507 = vunpack.c.l.b16 %v199
    %v508 = vunpack.c.h.b16 %v199
    %v509 = vunpack.c.l.b16 %v200
    %v510 = vunpack.c.h.b16 %v200
    %v511 = vunpack.c.l.b16 %v201
    %v512 = vunpack.c.h.b16 %v201
    %v513 = vunpack.c.l.b16 %v202
    %v514 = vunpack.c.h.b16 %v202
    %v515 = vunpack.c.l.b16 %v203
    %v516 = vunpack.c.h.b16 %v203
    %v517 = vunpack.c.l.b16 %v204
    %v518 = vunpack.c.h.b16 %v204
    %v519 = vunpack.c.l.b16 %v205
    %v520 = vunpack.c.h.b16 %v205
    %v521 = vunpack.c.l.b16 %v206
    %v522 = vunpack.c.h.b16 %v206
    %v523 = vunpack.c.l.b16 %v207
    %v524 = vunpack.c.h.b16 %v207
    %v525 = vunpack.c.l.b16 %v208
    %v526 = vunpack.c.h.b16 %v208
    %v527 = vunpack.c.l.b16 %v209
    %v528 = vunpack.c.h.b16 %v209
    %v529 = vunpack.c.l.b16 %v210
    %v530 = vunpack.c.h.b16 %v210
    %v531 = vunpack.c.l.b16 %v211
    %v532 = vunpack.c.h.b16 %v211
    %v533 = vunpack.c.l.b16 %v212
    %v534 = vunpack.c.h.b16 %v212
    %v535 = vunpack.c.l.b16 %v213
    %v536 = vunpack.c.h.b16 %v213
    %v537 = vunpack.c.l.b16 %v214
    %v538 = vunpack.c.h.b16 %v214
    %v539 = vunpack.c.l.b16 %v215
    %v540 = vunpack.c.h.b16 %v215
    %v541 = vunpack.c.l.b16 %v216
    %v542 = vunpack.c.h.b16 %v216
    %v543 = vunpack.c.l.b16 %v217
    %v544 = vunpack.c.h.b16 %v217
    %v545 = vunpack.c.l.b16 %v218
    %v546 = vunpack.c.h.b16 %v218
    %v547 = vunpack.c.l.b16 %v219
    %v548 = vunpack.c.h.b16 %v219
    %v549 = vunpack.c.l.b16 %v220
    %v550 = vunpack.c.h.b16 %v220
    %v551 = vunpack.c.l.b16 %v221
    %v552 = vunpack.c.h.b16 %v221
    %v553 = vunpack.c.l.b16 %v222
    %v554 = vunpack.c.h.b16 %v222
    %v555 = vunpack.c.l.b16 %v223
    %v556 = vunpack.c.h.b16 %v223
    %v557 = vunpack.c.l.b16 %v224
    %v558 = vunpack.c.h.b16 %v224
    %v559 = vunpack.c.l.b16 %v225
    %v560 = vunpack.c.h.b16 %v225
    %v561 = vunpack.c.l.b16 %v226
    %v562 = vunpack.c.h.b16 %v226
    %v563 = vunpack.c.l.b16 %v227
    %v564 = vunpack.c.h.b16 %v227
    %v565 = vunpack.c.l.b16 %v228
    %v566 = vunpack.c.h.b16 %v228
    %v567 = vunpack.c.l.b16 %v229
    %v568 = vunpack.c.h.b16 %v229
    %v569 = vunpack.c.l.b16 %v230
    %v570 = vunpack.c.h.b16 %v230
    %v571 = vunpack.c.l.b16 %v231
    %v572 = vunpack.c.h.b16 %v231
    %v573 = vunpack.c.l.b16 %v232
    %v574 = vunpack.c.h.b16 %v232
    %v575 = vpack.c.b16 %v353, %v351
    %v576 = vpack.c.b16 %v354, %v352
    %v577 = vpack.c.b16 %v357, %v355
    %v578 = vpack.c.b16 %v358, %v356
    %v579 = vpack.c.b16 %v361, %v359
    %v580 = vpack.c.b16 %v362, %v360
    %v581 = vpack.c.b16 %v365, %v363
    %v582 = vpack.c.b16 %v366, %v364
    %v583 = vpack.c.b16 %v369, %v367
    %v584 = vpack.c.b16 %v370, %v368
    %v585 = vpack.c.b16 %v373, %v371
    %v586 = vpack.c.b16 %v374, %v372
    %v587 = vpack.c.b16 %v377, %v375
    %v588 = vpack.c.b16 %v378, %v376
    %v589 = vpack.c.b16 %v381, %v379
    %v590 = vpack.c.b16 %v382, %v380
    %v591 = vpack.c.b16 %v385, %v383
    %v592 = vpack.c.b16 %v386, %v384
    %v593 = vpack.c.b16 %v389, %v387
    %v594 = vpack.c.b16 %v390, %v388
    %v595 = vpack.c.b16 %v393, %v391
    %v596 = vpack.c.b16 %v394, %v392
    %v597 = vpack.c.b16 %v397, %v395
    %v598 = vpack.c.b16 %v398, %v396
    %v599 = vpack.c.b16 %v401, %v399
    %v600 = vpack.c.b16 %v402, %v400
    %v601 = vpack.c.b16 %v405, %v403
    %v602 = vpack.c.b16 %v406, %v404
    %v603 = vpack.c.b16 %v409, %v407
    %v604 = vpack.c.b16 %v410, %v408
    %v605 = vpack.c.b16 %v413, %v411
    %v606 = vpack.c.b16 %v414, %v412
    %v607 = vpack.c.b16 %v417, %v415
    %v608 = vpack.c.b16 %v418, %v416
    %v609 = vpack.c.b16 %v421, %v419
    %v610 = vpack.c.b16 %v422, %v420
    %v611 = vpack.c.b16 %v425, %v423
    %v612 = vpack.c.b16 %v426, %v424
    %v613 = vpack.c.b16 %v429, %v427
    %v614 = vpack.c.b16 %v430, %v428
    %v615 = vpack.c.b16 %v433, %v431
    %v616 = vpack.c.b16 %v434, %v432
    %v617 = vpack.c.b16 %v437, %v435
    %v618 = vpack.c.b16 %v438, %v436
    %v619 = vpack.c.b16 %v441, %v439
    %v620 = vpack.c.b16 %v442, %v440
    %v621 = vpack.c.b16 %v445, %v443
    %v622 = vpack.c.b16 %v446, %v444
    %v623 = vpack.c.b16 %v449, %v447
    %v624 = vpack.c.b16 %v450, %v448
    %v625 = vpack.c.b16 %v453, %v451
    %v626 = vpack.c.b16 %v454, %v452
    %v627 = vpack.c.b16 %v457, %v455
    %v628 = vpack.c.b16 %v458, %v456
    %v629 = vpack.c.b16 %v461, %v459
    %v630 = vpack.c.b16 %v462, %v460
    %v631 = vpack.c.b16 %v465, %v463
    %v632 = vpack.c.b16 %v466, %v464
    %v633 = vpack.c.b16 %v469, %v467
    %v634 = vpack.c.b16 %v470, %v468
    %v635 = vpack.c.b16 %v473, %v471
    %v636 = vpack.c.b16 %v474, %v472
    %v637 = vpack.c.b16 %v477, %v475
    %v638 = vpack.c.b16 %v478, %v476
    %v639 = vpack.c.b16 %v481, %v479
    %v640 = vpack.c.b16 %v482, %v480
    %v641 = vpack.c.b16 %v485, %v483
    %v642 = vpack.c.b16 %v486, %v484
    %v643 = vpack.c.b16 %v489, %v487
    %v644 = vpack.c.b16 %v490, %v488
    %v645 = vpack.c.b16 %v493, %v491
    %v646 = vpack.c.b16 %v494, %v492
    %v647 = vpack.c.b16 %v497, %v495
    %v648 = vpack.c.b16 %v498, %v496
    %v649 = vpack.c.b16 %v501, %v499
    %v650 = vpack.c.b16 %v502, %v500
    %v651 = vpack.c.b16 %v505, %v503
    %v652 = vpack.c.b16 %v506, %v504
    %v653 = vpack.c.b16 %v509, %v507
    %v654 = vpack.c.b16 %v510, %v508
    %v655 = vpack.c.b16 %v513, %v511
    %v656 = vpack.c.b16 %v514, %v512
    %v657 = vpack.c.b16 %v517, %v515
    %v658 = vpack.c.b16 %v518, %v516
    %v659 = vpack.c.b16 %v521, %v519
    %v660 = vpack.c.b16 %v522, %v520
    %v661 = vpack.c.b16 %v525, %v523
    %v662 = vpack.c.b16 %v526, %v524
    %v663 = vpack.c.b16 %v529, %v527
    %v664 = vpack.c.b16 %v530, %v528
    %v665 = vpack.c.b16 %v533, %v531
    %v666 = vpack.c.b16 %v534, %v532
    %v667 = vpack.c.b16 %v537, %v535
    %v668 = vpack.c.b16 %v538, %v536
    %v669 = vpack.c.b16 %v541, %v539
    %v670 = vpack.c.b16 %v542, %v540
    %v671 = vpack.c.b16 %v545, %v543
    %v672 = vpack.c.b16 %v546, %v544
    %v673 = vpack.c.b16 %v549, %v547
    %v674 = vpack.c.b16 %v550, %v548
    %v675 = vpack.c.b16 %v553, %v551
    %v676 = vpack.c.b16 %v554, %v552
    %v677 = vpack.c.b16 %v557, %v555
    %v678 = vpack.c.b16 %v558, %v556
    %v679 = vpack.c.b16 %v561, %v559
    %v680 = vpack.c.b16 %v562, %v560
    %v681 = vpack.c.b16 %v565, %v563
    %v682 = vpack.c.b16 %v566, %v564
    %v683 = vpack.c.b16 %v569, %v567
    %v684 = vpack.c.b16 %v570, %v568
    %v685 = vpack.c.b16 %v573, %v571
    %v686 = vpack.c.b16 %v574, %v572
    %799 = vmatpush.bf16.msra.mxu0 %v589
    %800 = vmatpush.bf16.msra.mxu0 %v587
    %801 = vmatpush.bf16.msra.mxu0 %v585
    %802 = vmatpush.bf16.msra.mxu0 %v583
    %803 = vmatpush.bf16.msra.mxu0 %v581
    %804 = vmatpush.bf16.msra.mxu0 %v579
    %805 = vmatpush.bf16.msra.mxu0 %v577
    %806 = vmatpush.bf16.msra.mxu0 %v575
    %807 = vmatmul.bf16.gmra.mxu0 %v114
    %v808 = vpop.f32.mrf.mxu0
    %v809 = vadd.f32 %v235, %v808
    %v810 = vpop.f32.mrf.mxu0
    %811 = vdwg.mxu0
    %812 = vmatpush.bf16.msra.mxu0 %v605
    %813 = vmatpush.bf16.msra.mxu0 %v603
    %814 = vmatpush.bf16.msra.mxu0 %v601
    %815 = vmatpush.bf16.msra.mxu0 %v599
    %816 = vmatpush.bf16.msra.mxu0 %v597
    %817 = vmatpush.bf16.msra.mxu0 %v595
    %818 = vmatpush.bf16.msra.mxu0 %v593
    %819 = vmatpush.bf16.msra.mxu0 %v591
    %820 = vmatmul.bf16.gmra.mxu0 %v115
    %v821 = vpop.f32.mrf.mxu0
    %v822 = vadd.f32 %v809, %v821
    %v823 = vpop.f32.mrf.mxu0
    %824 = vdwg.mxu0
    %825 = vmatpush.bf16.msra.mxu0 %v621
    %826 = vmatpush.bf16.msra.mxu0 %v619
    %827 = vmatpush.bf16.msra.mxu0 %v617
    %828 = vmatpush.bf16.msra.mxu0 %v615
    %829 = vmatpush.bf16.msra.mxu0 %v613
    %830 = vmatpush.bf16.msra.mxu0 %v611
    %831 = vmatpush.bf16.msra.mxu0 %v609
    %832 = vmatpush.bf16.msra.mxu0 %v607
    %833 = vmatmul.bf16.gmra.mxu0 %v116
    %v834 = vpop.f32.mrf.mxu0
    %v835 = vadd.f32 %v822, %v834
    %v836 = vpop.f32.mrf.mxu0
    %837 = vdwg.mxu0
    %838 = vmatpush.bf16.msra.mxu0 %v637
    %839 = vmatpush.bf16.msra.mxu0 %v635
    %840 = vmatpush.bf16.msra.mxu0 %v633
    %841 = vmatpush.bf16.msra.mxu0 %v631
    %842 = vmatpush.bf16.msra.mxu0 %v629
    %843 = vmatpush.bf16.msra.mxu0 %v627
    %844 = vmatpush.bf16.msra.mxu0 %v625
    %845 = vmatpush.bf16.msra.mxu0 %v623
    %846 = vmatmul.bf16.gmra.mxu0 %v117
    %v847 = vpop.f32.mrf.mxu0
    %v848 = vadd.f32 %v835, %v847
    %v849 = vpop.f32.mrf.mxu0
    %850 = vdwg.mxu0
    %851 = vmatpush.bf16.msra.mxu0 %v653
    %852 = vmatpush.bf16.msra.mxu0 %v651
    %853 = vmatpush.bf16.msra.mxu0 %v649
    %854 = vmatpush.bf16.msra.mxu0 %v647
    %855 = vmatpush.bf16.msra.mxu0 %v645
    %856 = vmatpush.bf16.msra.mxu0 %v643
    %857 = vmatpush.bf16.msra.mxu0 %v641
    %858 = vmatpush.bf16.msra.mxu0 %v639
    %859 = vmatmul.bf16.gmra.mxu0 %v118
    %v860 = vpop.f32.mrf.mxu0
    %v861 = vadd.f32 %v848, %v860
    %v862 = vpop.f32.mrf.mxu0
    %863 = vdwg.mxu0
    %864 = vmatpush.bf16.msra.mxu0 %v669
    %865 = vmatpush.bf16.msra.mxu0 %v667
    %866 = vmatpush.bf16.msra.mxu0 %v665
    %867 = vmatpush.bf16.msra.mxu0 %v663
    %868 = vmatpush.bf16.msra.mxu0 %v661
    %869 = vmatpush.bf16.msra.mxu0 %v659
    %870 = vmatpush.bf16.msra.mxu0 %v657
    %871 = vmatpush.bf16.msra.mxu0 %v655
    %872 = vmatmul.bf16.gmra.mxu0 %v119
    %v873 = vpop.f32.mrf.mxu0
    %v874 = vadd.f32 %v861, %v873
    %v875 = vpop.f32.mrf.mxu0
    %876 = vdwg.mxu0
    %877 = vmatpush.bf16.msra.mxu0 %v685
    %878 = vmatpush.bf16.msra.mxu0 %v683
    %879 = vmatpush.bf16.msra.mxu0 %v681
    %880 = vmatpush.bf16.msra.mxu0 %v679
    %881 = vmatpush.bf16.msra.mxu0 %v677
    %882 = vmatpush.bf16.msra.mxu0 %v675
    %883 = vmatpush.bf16.msra.mxu0 %v673
    %884 = vmatpush.bf16.msra.mxu0 %v671
    %885 = vmatmul.bf16.gmra.mxu0 %v120
    %v886 = vpop.f32.mrf.mxu0
    %v887 = vadd.f32 %v874, %v886
    %v888 = vpop.f32.mrf.mxu0
    %889 = vdwg.mxu0
    %890 = vmatpush.bf16.msra.mxu0 %v590
    %891 = vmatpush.bf16.msra.mxu0 %v588
    %892 = vmatpush.bf16.msra.mxu0 %v586
    %893 = vmatpush.bf16.msra.mxu0 %v584
    %894 = vmatpush.bf16.msra.mxu0 %v582
    %895 = vmatpush.bf16.msra.mxu0 %v580
    %896 = vmatpush.bf16.msra.mxu0 %v578
    %897 = vmatpush.bf16.msra.mxu0 %v576
    %898 = vmatmul.bf16.gmra.mxu0 %v114
    %v899 = vpop.f32.mrf.mxu0
    %v900 = vadd.f32 %v236, %v899
    %v901 = vpop.f32.mrf.mxu0
    %902 = vdwg.mxu0
    %903 = vmatpush.bf16.msra.mxu0 %v606
    %904 = vmatpush.bf16.msra.mxu0 %v604
    %905 = vmatpush.bf16.msra.mxu0 %v602
    %906 = vmatpush.bf16.msra.mxu0 %v600
    %907 = vmatpush.bf16.msra.mxu0 %v598
    %908 = vmatpush.bf16.msra.mxu0 %v596
    %909 = vmatpush.bf16.msra.mxu0 %v594
    %910 = vmatpush.bf16.msra.mxu0 %v592
    %911 = vmatmul.bf16.gmra.mxu0 %v115
    %v912 = vpop.f32.mrf.mxu0
    %v913 = vadd.f32 %v900, %v912
    %v914 = vpop.f32.mrf.mxu0
    %915 = vdwg.mxu0
    %916 = vmatpush.bf16.msra.mxu0 %v622
    %917 = vmatpush.bf16.msra.mxu0 %v620
    %918 = vmatpush.bf16.msra.mxu0 %v618
    %919 = vmatpush.bf16.msra.mxu0 %v616
    %920 = vmatpush.bf16.msra.mxu0 %v614
    %921 = vmatpush.bf16.msra.mxu0 %v612
    %922 = vmatpush.bf16.msra.mxu0 %v610
    %923 = vmatpush.bf16.msra.mxu0 %v608
    %924 = vmatmul.bf16.gmra.mxu0 %v116
    %v925 = vpop.f32.mrf.mxu0
    %v926 = vadd.f32 %v913, %v925
    %v927 = vpop.f32.mrf.mxu0
    %928 = vdwg.mxu0
    %929 = vmatpush.bf16.msra.mxu0 %v638
    %930 = vmatpush.bf16.msra.mxu0 %v636
    %931 = vmatpush.bf16.msra.mxu0 %v634
    %932 = vmatpush.bf16.msra.mxu0 %v632
    %933 = vmatpush.bf16.msra.mxu0 %v630
    %934 = vmatpush.bf16.msra.mxu0 %v628
    %935 = vmatpush.bf16.msra.mxu0 %v626
    %936 = vmatpush.bf16.msra.mxu0 %v624
    %937 = vmatmul.bf16.gmra.mxu0 %v117
    %v938 = vpop.f32.mrf.mxu0
    %v939 = vadd.f32 %v926, %v938
    %v940 = vpop.f32.mrf.mxu0
    %941 = vdwg.mxu0
    %942 = vmatpush.bf16.msra.mxu0 %v654
    %943 = vmatpush.bf16.msra.mxu0 %v652
    %944 = vmatpush.bf16.msra.mxu0 %v650
    %945 = vmatpush.bf16.msra.mxu0 %v648
    %946 = vmatpush.bf16.msra.mxu0 %v646
    %947 = vmatpush.bf16.msra.mxu0 %v644
    %948 = vmatpush.bf16.msra.mxu0 %v642
    %949 = vmatpush.bf16.msra.mxu0 %v640
    %950 = vmatmul.bf16.gmra.mxu0 %v118
    %v951 = vpop.f32.mrf.mxu0
    %v952 = vadd.f32 %v939, %v951
    %v953 = vpop.f32.mrf.mxu0
    %954 = vdwg.mxu0
    %955 = vmatpush.bf16.msra.mxu0 %v670
    %956 = vmatpush.bf16.msra.mxu0 %v668
    %957 = vmatpush.bf16.msra.mxu0 %v666
    %958 = vmatpush.bf16.msra.mxu0 %v664
    %959 = vmatpush.bf16.msra.mxu0 %v662
    %960 = vmatpush.bf16.msra.mxu0 %v660
    %961 = vmatpush.bf16.msra.mxu0 %v658
    %962 = vmatpush.bf16.msra.mxu0 %v656
    %963 = vmatmul.bf16.gmra.mxu0 %v119
    %v964 = vpop.f32.mrf.mxu0
    %v965 = vadd.f32 %v952, %v964
    %v966 = vpop.f32.mrf.mxu0
    %967 = vdwg.mxu0
    %968 = vmatpush.bf16.msra.mxu0 %v686
    %969 = vmatpush.bf16.msra.mxu0 %v684
    %970 = vmatpush.bf16.msra.mxu0 %v682
    %971 = vmatpush.bf16.msra.mxu0 %v680
    %972 = vmatpush.bf16.msra.mxu0 %v678
    %973 = vmatpush.bf16.msra.mxu0 %v676
    %974 = vmatpush.bf16.msra.mxu0 %v674
    %975 = vmatpush.bf16.msra.mxu0 %v672
    %976 = vmatmul.bf16.gmra.mxu0 %v120
    %v977 = vpop.f32.mrf.mxu0
    %v978 = vadd.f32 %v965, %v977
    %v979 = vpop.f32.mrf.mxu0
    %980 = vdwg.mxu0
    %v981 = vmax.f32 %v887, 0.0
    %v982 = vmax.f32 %v978, 0.0
    %v983 = vpack.c.bf16 %v981, %v981
    %v984 = vpack.c.bf16 %v982, %v982
    %v985 = vld [vmem:[%s3] sm:$0xf]
    %v986 = vld [vmem:[%s3 + $0x4] sm:$0xf]
    %v987 = vld [vmem:[%s3 + $0x8] sm:$0xf]
    %v988 = vld [vmem:[%s3 + $0xc] sm:$0xf]
    %v989 = vld [vmem:[%s3 + $0x10] sm:$0xf]
    %v990 = vld [vmem:[%s3 + $0x14] sm:$0xf]
    %v991 = vld [vmem:[%s3 + $0x18] sm:$0xf]
    %v992 = vld [vmem:[%s3 + $0x1c] sm:$0xf]
    %v993 = vld [vmem:[%s3 + $0x20] sm:$0xf]
    %v994 = vld [vmem:[%s3 + $0x24] sm:$0xf]
    %v995 = vld [vmem:[%s3 + $0x28] sm:$0xf]
    %v996 = vld [vmem:[%s3 + $0x2c] sm:$0xf]
    %v997 = vld [vmem:[%s3 + $0x30] sm:$0xf]
    %v998 = vld [vmem:[%s3 + $0x34] sm:$0xf]
    %v999 = vld [vmem:[%s3 + $0x38] sm:$0xf]
    %v1000 = vld [vmem:[%s3 + $0x3c] sm:$0xf]
    %v1001 = vld [vmem:[%s3 + $0x40] sm:$0xf]
    %v1002 = vld [vmem:[%s3 + $0x44] sm:$0xf]
    %v1003 = vld [vmem:[%s3 + $0x48] sm:$0xf]
    %v1004 = vld [vmem:[%s3 + $0x4c] sm:$0xf]
    %v1005 = vld [vmem:[%s3 + $0x50] sm:$0xf]
    %v1006 = vld [vmem:[%s3 + $0x54] sm:$0xf]
    %v1007 = vld [vmem:[%s3 + $0x58] sm:$0xf]
    %v1008 = vld [vmem:[%s3 + $0x5c] sm:$0xf]
    %v1009 = vld [vmem:[%s3 + $0x60] sm:$0xf]
    %v1010 = vld [vmem:[%s3 + $0x64] sm:$0xf]
    %v1011 = vld [vmem:[%s3 + $0x68] sm:$0xf]
    %v1012 = vld [vmem:[%s3 + $0x6c] sm:$0xf]
    %v1013 = vld [vmem:[%s3 + $0x70] sm:$0xf]
    %v1014 = vld [vmem:[%s3 + $0x74] sm:$0xf]
    %v1015 = vld [vmem:[%s3 + $0x78] sm:$0xf]
    %v1016 = vld [vmem:[%s3 + $0x7c] sm:$0xf]
    %v1017 = vld [vmem:[%s4] sm:$0x1]
    %v1019 = vperm.slane %v1017, 0
    %v1053 = vunpack.c.l.b16 %v985
    %v1054 = vunpack.c.l.b16 %v986
    %v1055 = vunpack.c.l.b16 %v987
    %v1056 = vunpack.c.l.b16 %v988
    %v1057 = vunpack.c.l.b16 %v989
    %v1058 = vunpack.c.l.b16 %v990
    %v1059 = vunpack.c.l.b16 %v991
    %v1060 = vunpack.c.l.b16 %v992
    %v1061 = vunpack.c.l.b16 %v993
    %v1062 = vunpack.c.l.b16 %v994
    %v1063 = vunpack.c.l.b16 %v995
    %v1064 = vunpack.c.l.b16 %v996
    %v1065 = vunpack.c.l.b16 %v997
    %v1066 = vunpack.c.l.b16 %v998
    %v1067 = vunpack.c.l.b16 %v999
    %v1068 = vunpack.c.l.b16 %v1000
    %v1069 = vunpack.c.l.b16 %v1001
    %v1070 = vunpack.c.l.b16 %v1002
    %v1071 = vunpack.c.l.b16 %v1003
    %v1072 = vunpack.c.l.b16 %v1004
    %v1073 = vunpack.c.l.b16 %v1005
    %v1074 = vunpack.c.l.b16 %v1006
    %v1075 = vunpack.c.l.b16 %v1007
    %v1076 = vunpack.c.l.b16 %v1008
    %v1077 = vunpack.c.l.b16 %v1009
    %v1078 = vunpack.c.l.b16 %v1010
    %v1079 = vunpack.c.l.b16 %v1011
    %v1080 = vunpack.c.l.b16 %v1012
    %v1081 = vunpack.c.l.b16 %v1013
    %v1082 = vunpack.c.l.b16 %v1014
    %v1083 = vunpack.c.l.b16 %v1015
    %v1084 = vunpack.c.l.b16 %v1016
    %v1085 = vpack.c.b16 %v1054, %v1053
    %v1086 = vpack.c.b16 %v1056, %v1055
    %v1087 = vpack.c.b16 %v1058, %v1057
    %v1088 = vpack.c.b16 %v1060, %v1059
    %v1089 = vpack.c.b16 %v1062, %v1061
    %v1090 = vpack.c.b16 %v1064, %v1063
    %v1091 = vpack.c.b16 %v1066, %v1065
    %v1092 = vpack.c.b16 %v1068, %v1067
    %v1093 = vpack.c.b16 %v1070, %v1069
    %v1094 = vpack.c.b16 %v1072, %v1071
    %v1095 = vpack.c.b16 %v1074, %v1073
    %v1096 = vpack.c.b16 %v1076, %v1075
    %v1097 = vpack.c.b16 %v1078, %v1077
    %v1098 = vpack.c.b16 %v1080, %v1079
    %v1099 = vpack.c.b16 %v1082, %v1081
    %v1100 = vpack.c.b16 %v1084, %v1083
    %1117 = vmatpush.bf16.msra.mxu0 %v1092
    %1118 = vmatpush.bf16.msra.mxu0 %v1091
    %1119 = vmatpush.bf16.msra.mxu0 %v1090
    %1120 = vmatpush.bf16.msra.mxu0 %v1089
    %1121 = vmatpush.bf16.msra.mxu0 %v1088
    %1122 = vmatpush.bf16.msra.mxu0 %v1087
    %1123 = vmatpush.bf16.msra.mxu0 %v1086
    %1124 = vmatpush.bf16.msra.mxu0 %v1085
    %1125 = vmatmul.bf16.gmra.mxu0 %v983
    %v1126 = vpop.f32.mrf.mxu0
    %v1127 = vadd.f32 %v1019, %v1126
    %v1128 = vpop.f32.mrf.mxu0
    %1129 = vdwg.mxu0
    %1130 = vmatpush.bf16.msra.mxu0 %v1100
    %1131 = vmatpush.bf16.msra.mxu0 %v1099
    %1132 = vmatpush.bf16.msra.mxu0 %v1098
    %1133 = vmatpush.bf16.msra.mxu0 %v1097
    %1134 = vmatpush.bf16.msra.mxu0 %v1096
    %1135 = vmatpush.bf16.msra.mxu0 %v1095
    %1136 = vmatpush.bf16.msra.mxu0 %v1094
    %1137 = vmatpush.bf16.msra.mxu0 %v1093
    %1138 = vmatmul.bf16.gmra.mxu0 %v984
    %v1139 = vpop.f32.mrf.mxu0
    %v1140 = vadd.f32 %v1127, %v1139
    %v1141 = vpop.f32.mrf.mxu0
    %1142 = vdwg.mxu0
    %v1143 = vmax.f32 %v1140, 0.0
    %v1144 = vpack.c.bf16 %v1143, %v1143
    %v1145 = vld [vmem:[#allocation4] sm:$0xf]
    %v1146 = vld [vmem:[#allocation4 + $0x4] sm:$0xf]
    %v1147 = vld [vmem:[#allocation4 + $0x8] sm:$0xf]
    %v1148 = vld [vmem:[#allocation4 + $0xc] sm:$0xf]
    %v1149 = vld [vmem:[#allocation4 + $0x10] sm:$0xf]
    %v1150 = vld [vmem:[#allocation4 + $0x14] sm:$0xf]
    %v1151 = vld [vmem:[#allocation4 + $0x18] sm:$0xf]
    %v1152 = vld [vmem:[#allocation4 + $0x1c] sm:$0xf]
    %v1153 = vld [vmem:[#allocation4 + $0x20] sm:$0xf]
    %v1154 = vld [vmem:[#allocation4 + $0x24] sm:$0xf]
    %v1155 = vld [vmem:[#allocation4 + $0x28] sm:$0xf]
    %v1156 = vld [vmem:[#allocation4 + $0x2c] sm:$0xf]
    %v1157 = vld [vmem:[#allocation4 + $0x30] sm:$0xf]
    %v1158 = vld [vmem:[#allocation4 + $0x34] sm:$0xf]
    %v1159 = vld [vmem:[#allocation4 + $0x38] sm:$0xf]
    %v1160 = vld [vmem:[#allocation4 + $0x3c] sm:$0xf]
    %v1161 = vld [vmem:[%s6] sm:$0x1]
    %v1163 = vperm.slane %v1161, 0
    %v1181 = vunpack.c.l.b16 %v1145
    %v1182 = vunpack.c.l.b16 %v1146
    %v1183 = vunpack.c.l.b16 %v1147
    %v1184 = vunpack.c.l.b16 %v1148
    %v1185 = vunpack.c.l.b16 %v1149
    %v1186 = vunpack.c.l.b16 %v1150
    %v1187 = vunpack.c.l.b16 %v1151
    %v1188 = vunpack.c.l.b16 %v1152
    %v1189 = vunpack.c.l.b16 %v1153
    %v1190 = vunpack.c.l.b16 %v1154
    %v1191 = vunpack.c.l.b16 %v1155
    %v1192 = vunpack.c.l.b16 %v1156
    %v1193 = vunpack.c.l.b16 %v1157
    %v1194 = vunpack.c.l.b16 %v1158
    %v1195 = vunpack.c.l.b16 %v1159
    %v1196 = vunpack.c.l.b16 %v1160
    %v1197 = vpack.c.b16 %v1182, %v1181
    %v1198 = vpack.c.b16 %v1184, %v1183
    %v1199 = vpack.c.b16 %v1186, %v1185
    %v1200 = vpack.c.b16 %v1188, %v1187
    %v1201 = vpack.c.b16 %v1190, %v1189
    %v1202 = vpack.c.b16 %v1192, %v1191
    %v1203 = vpack.c.b16 %v1194, %v1193
    %v1204 = vpack.c.b16 %v1196, %v1195
    %1213 = vmatpush.bf16.msra.mxu0 %v1204
    %1214 = vmatpush.bf16.msra.mxu0 %v1203
    %1215 = vmatpush.bf16.msra.mxu0 %v1202
    %1216 = vmatpush.bf16.msra.mxu0 %v1201
    %1217 = vmatpush.bf16.msra.mxu0 %v1200
    %1218 = vmatpush.bf16.msra.mxu0 %v1199
    %1219 = vmatpush.bf16.msra.mxu0 %v1198
    %1220 = vmatpush.bf16.msra.mxu0 %v1197
    %1221 = vmatmul.bf16.gmra.mxu0 %v1144
    %v1222 = vpop.f32.mrf.mxu0
    %v1223 = vadd.f32 %v1163, %v1222
    %v1224 = vpop.f32.mrf.mxu0
    %1225 = vdwg.mxu0
    %v1226 = vmax.f32 %v1223, 0.0
    %v1227 = vpack.c.bf16 %v1226, %v1226
    %v1228 = vld [vmem:[#allocation6] sm:$0xf]
    %v1229 = vld [vmem:[#allocation6 + $0x4] sm:$0xf]
    %v1230 = vld [vmem:[#allocation6 + $0x8] sm:$0xf]
    %v1231 = vld [vmem:[#allocation6 + $0xc] sm:$0xf]
    %v1232 = vld [vmem:[#allocation6 + $0x10] sm:$0xf]
    %v1233 = vld [vmem:[#allocation6 + $0x14] sm:$0xf]
    %v1234 = vld [vmem:[#allocation6 + $0x18] sm:$0xf]
    %v1235 = vld [vmem:[#allocation6 + $0x1c] sm:$0xf]
    %v1236 = vld [vmem:[#allocation6 + $0x20] sm:$0xf]
    %v1237 = vld [vmem:[#allocation6 + $0x24] sm:$0xf]
    %v1238 = vld [vmem:[#allocation6 + $0x28] sm:$0xf]
    %v1239 = vld [vmem:[#allocation6 + $0x2c] sm:$0xf]
    %v1240 = vld [vmem:[#allocation6 + $0x30] sm:$0xf]
    %v1241 = vld [vmem:[#allocation6 + $0x34] sm:$0xf]
    %v1242 = vld [vmem:[#allocation6 + $0x38] sm:$0xf]
    %v1243 = vld [vmem:[#allocation6 + $0x3c] sm:$0xf]
    %v1244 = vld [vmem:[%s8] sm:$0x1]
    %v1246 = vperm.slane %v1244, 0
    %v1264 = vunpack.c.l.b16 %v1228
    %v1265 = vunpack.c.l.b16 %v1229
    %v1266 = vunpack.c.l.b16 %v1230
    %v1267 = vunpack.c.l.b16 %v1231
    %v1268 = vunpack.c.l.b16 %v1232
    %v1269 = vunpack.c.l.b16 %v1233
    %v1270 = vunpack.c.l.b16 %v1234
    %v1271 = vunpack.c.l.b16 %v1235
    %v1272 = vunpack.c.l.b16 %v1236
    %v1273 = vunpack.c.l.b16 %v1237
    %v1274 = vunpack.c.l.b16 %v1238
    %v1275 = vunpack.c.l.b16 %v1239
    %v1276 = vunpack.c.l.b16 %v1240
    %v1277 = vunpack.c.l.b16 %v1241
    %v1278 = vunpack.c.l.b16 %v1242
    %v1279 = vunpack.c.l.b16 %v1243
    %v1280 = vpack.c.b16 %v1265, %v1264
    %v1281 = vpack.c.b16 %v1267, %v1266
    %v1282 = vpack.c.b16 %v1269, %v1268
    %v1283 = vpack.c.b16 %v1271, %v1270
    %v1284 = vpack.c.b16 %v1273, %v1272
    %v1285 = vpack.c.b16 %v1275, %v1274
    %v1286 = vpack.c.b16 %v1277, %v1276
    %v1287 = vpack.c.b16 %v1279, %v1278
    %1296 = vmatpush.bf16.msra.mxu0 %v1287
    %1297 = vmatpush.bf16.msra.mxu0 %v1286
    %1298 = vmatpush.bf16.msra.mxu0 %v1285
    %1299 = vmatpush.bf16.msra.mxu0 %v1284
    %1300 = vmatpush.bf16.msra.mxu0 %v1283
    %1301 = vmatpush.bf16.msra.mxu0 %v1282
    %1302 = vmatpush.bf16.msra.mxu0 %v1281
    %1303 = vmatpush.bf16.msra.mxu0 %v1280
    %1304 = vmatmul.bf16.gmra.mxu0 %v1227
    %v1305 = vpop.f32.mrf.mxu0
    %v1306 = vadd.f32 %v1246, %v1305
    %v1307 = vpop.f32.mrf.mxu0
    %1308 = vdwg.mxu0
    %v1309 = vmax.f32 %v1306, 0.0
    %v1310 = vpack.c.bf16 %v1309, %v1309
    %v1311 = vld [vmem:[%s9] sm:$0xff]
    %v1312 = vld [vmem:[%s9 + $0x8] sm:$0xff]
    %v1313 = vld [vmem:[%s9 + $0x10] sm:$0xff]
    %v1314 = vld [vmem:[%s9 + $0x18] sm:$0xff]
    %v1315 = vld [vmem:[%s9 + $0x20] sm:$0xff]
    %v1316 = vld [vmem:[%s9 + $0x28] sm:$0xff]
    %v1317 = vld [vmem:[%s9 + $0x30] sm:$0xff]
    %v1318 = vld [vmem:[%s9 + $0x38] sm:$0xff]
    %v1319 = vld [vmem:[%s9 + $0x40] sm:$0xff]
    %v1320 = vld [vmem:[%s9 + $0x48] sm:$0xff]
    %v1321 = vld [vmem:[%s9 + $0x50] sm:$0xff]
    %v1322 = vld [vmem:[%s9 + $0x58] sm:$0xff]
    %v1323 = vld [vmem:[%s9 + $0x60] sm:$0xff]
    %v1324 = vld [vmem:[%s9 + $0x68] sm:$0xff]
    %v1325 = vld [vmem:[%s9 + $0x70] sm:$0xff]
    %v1326 = vld [vmem:[%s9 + $0x78] sm:$0xff]
    %v1327 = vld [vmem:[%s10] sm:$0x3]
    %v1329 = vperm.slane %v1327, 0
    %v1330 = vperm.slane %v1327, 1
    %v1349 = vunpack.c.l.b16 %v1311
    %v1350 = vunpack.c.h.b16 %v1311
    %v1351 = vunpack.c.l.b16 %v1312
    %v1352 = vunpack.c.h.b16 %v1312
    %v1353 = vunpack.c.l.b16 %v1313
    %v1354 = vunpack.c.h.b16 %v1313
    %v1355 = vunpack.c.l.b16 %v1314
    %v1356 = vunpack.c.h.b16 %v1314
    %v1357 = vunpack.c.l.b16 %v1315
    %v1358 = vunpack.c.h.b16 %v1315
    %v1359 = vunpack.c.l.b16 %v1316
    %v1360 = vunpack.c.h.b16 %v1316
    %v1361 = vunpack.c.l.b16 %v1317
    %v1362 = vunpack.c.h.b16 %v1317
    %v1363 = vunpack.c.l.b16 %v1318
    %v1364 = vunpack.c.h.b16 %v1318
    %v1365 = vunpack.c.l.b16 %v1319
    %v1366 = vunpack.c.h.b16 %v1319
    %v1367 = vunpack.c.l.b16 %v1320
    %v1368 = vunpack.c.h.b16 %v1320
    %v1369 = vunpack.c.l.b16 %v1321
    %v1370 = vunpack.c.h.b16 %v1321
    %v1371 = vunpack.c.l.b16 %v1322
    %v1372 = vunpack.c.h.b16 %v1322
    %v1373 = vunpack.c.l.b16 %v1323
    %v1374 = vunpack.c.h.b16 %v1323
    %v1375 = vunpack.c.l.b16 %v1324
    %v1376 = vunpack.c.h.b16 %v1324
    %v1377 = vunpack.c.l.b16 %v1325
    %v1378 = vunpack.c.h.b16 %v1325
    %v1379 = vunpack.c.l.b16 %v1326
    %v1380 = vunpack.c.h.b16 %v1326
    %v1381 = vpack.c.b16 %v1351, %v1349
    %v1382 = vpack.c.b16 %v1352, %v1350
    %v1383 = vpack.c.b16 %v1355, %v1353
    %v1384 = vpack.c.b16 %v1356, %v1354
    %v1385 = vpack.c.b16 %v1359, %v1357
    %v1386 = vpack.c.b16 %v1360, %v1358
    %v1387 = vpack.c.b16 %v1363, %v1361
    %v1388 = vpack.c.b16 %v1364, %v1362
    %v1389 = vpack.c.b16 %v1367, %v1365
    %v1390 = vpack.c.b16 %v1368, %v1366
    %v1391 = vpack.c.b16 %v1371, %v1369
    %v1392 = vpack.c.b16 %v1372, %v1370
    %v1393 = vpack.c.b16 %v1375, %v1373
    %v1394 = vpack.c.b16 %v1376, %v1374
    %v1395 = vpack.c.b16 %v1379, %v1377
    %v1396 = vpack.c.b16 %v1380, %v1378
    %1413 = vmatpush.bf16.msra.mxu0 %v1395
    %1414 = vmatpush.bf16.msra.mxu0 %v1393
    %1415 = vmatpush.bf16.msra.mxu0 %v1391
    %1416 = vmatpush.bf16.msra.mxu0 %v1389
    %1417 = vmatpush.bf16.msra.mxu0 %v1387
    %1418 = vmatpush.bf16.msra.mxu0 %v1385
    %1419 = vmatpush.bf16.msra.mxu0 %v1383
    %1420 = vmatpush.bf16.msra.mxu0 %v1381
    %1421 = vmatmul.bf16.gmra.mxu0 %v1310
    %v1422 = vpop.f32.mrf.mxu0
    %v1423 = vadd.f32 %v1329, %v1422
    %v1424 = vpop.f32.mrf.mxu0
    %1425 = vdwg.mxu0
    %1426 = vmatpush.bf16.msra.mxu0 %v1396
    %1427 = vmatpush.bf16.msra.mxu0 %v1394
    %1428 = vmatpush.bf16.msra.mxu0 %v1392
    %1429 = vmatpush.bf16.msra.mxu0 %v1390
    %1430 = vmatpush.bf16.msra.mxu0 %v1388
    %1431 = vmatpush.bf16.msra.mxu0 %v1386
    %1432 = vmatpush.bf16.msra.mxu0 %v1384
    %1433 = vmatpush.bf16.msra.mxu0 %v1382
    %1434 = vmatmul.bf16.gmra.mxu0 %v1310
    %v1435 = vpop.f32.mrf.mxu0
    %v1436 = vadd.f32 %v1330, %v1435
    %v1437 = vpop.f32.mrf.mxu0
    %1438 = vdwg.mxu0
    %v1439 = vmax.f32 %v1423, 0.0
    %v1440 = vmax.f32 %v1436, 0.0
    %v1441 = vpack.c.bf16 %v1439, %v1439
    %v1442 = vpack.c.bf16 %v1440, %v1440
    %v1443 = vld [vmem:[#allocation7] sm:$0xff]
    %v1444 = vld [vmem:[#allocation7 + $0x8] sm:$0xff]
    %v1445 = vld [vmem:[#allocation7 + $0x10] sm:$0xff]
    %v1446 = vld [vmem:[#allocation7 + $0x18] sm:$0xf]
    %v1447 = vld [vmem:[#allocation7 + $0x1c] sm:$0xff]
    %v1448 = vld [vmem:[#allocation7 + $0x24] sm:$0xff]
    %v1449 = vld [vmem:[#allocation7 + $0x2c] sm:$0xff]
    %v1450 = vld [vmem:[#allocation7 + $0x34] sm:$0xf]
    %v1451 = vld [vmem:[#allocation7 + $0x38] sm:$0xff]
    %v1452 = vld [vmem:[#allocation7 + $0x40] sm:$0xff]
    %v1453 = vld [vmem:[#allocation7 + $0x48] sm:$0xff]
    %v1454 = vld [vmem:[#allocation7 + $0x50] sm:$0xf]
    %v1455 = vld [vmem:[#allocation7 + $0x54] sm:$0xff]
    %v1456 = vld [vmem:[#allocation7 + $0x5c] sm:$0xff]
    %v1457 = vld [vmem:[#allocation7 + $0x64] sm:$0xff]
    %v1458 = vld [vmem:[#allocation7 + $0x6c] sm:$0xf]
    %v1459 = vld [vmem:[#allocation7 + $0x70] sm:$0xff]
    %v1460 = vld [vmem:[#allocation7 + $0x78] sm:$0xff]
    %v1461 = vld [vmem:[#allocation7 + $0x80] sm:$0xff]
    %v1462 = vld [vmem:[#allocation7 + $0x88] sm:$0xf]
    %v1463 = vld [vmem:[#allocation7 + $0x8c] sm:$0xff]
    %v1464 = vld [vmem:[#allocation7 + $0x94] sm:$0xff]
    %v1465 = vld [vmem:[#allocation7 + $0x9c] sm:$0xff]
    %v1466 = vld [vmem:[#allocation7 + $0xa4] sm:$0xf]
    %v1467 = vld [vmem:[#allocation7 + $0xa8] sm:$0xff]
    %v1468 = vld [vmem:[#allocation7 + $0xb0] sm:$0xff]
    %v1469 = vld [vmem:[#allocation7 + $0xb8] sm:$0xff]
    %v1470 = vld [vmem:[#allocation7 + $0xc0] sm:$0xf]
    %v1471 = vld [vmem:[#allocation7 + $0xc4] sm:$0xff]
    %v1472 = vld [vmem:[#allocation7 + $0xcc] sm:$0xff]
    %v1473 = vld [vmem:[#allocation7 + $0xd4] sm:$0xff]
    %v1474 = vld [vmem:[#allocation7 + $0xdc] sm:$0xf]
    %v1475 = vld [vmem:[#allocation7 + $0xe0] sm:$0xff]
    %v1476 = vld [vmem:[#allocation7 + $0xe8] sm:$0xff]
    %v1477 = vld [vmem:[#allocation7 + $0xf0] sm:$0xff]
    %v1478 = vld [vmem:[#allocation7 + $0xf8] sm:$0xf]
    %v1479 = vld [vmem:[#allocation7 + $0xfc] sm:$0xff]
    %v1480 = vld [vmem:[#allocation7 + $0x104] sm:$0xff]
    %v1481 = vld [vmem:[#allocation7 + $0x10c] sm:$0xff]
    %v1482 = vld [vmem:[#allocation7 + $0x114] sm:$0xf]
    %v1483 = vld [vmem:[#allocation7 + $0x118] sm:$0xff]
    %v1484 = vld [vmem:[#allocation7 + $0x120] sm:$0xff]
    %v1485 = vld [vmem:[#allocation7 + $0x128] sm:$0xff]
    %v1486 = vld [vmem:[#allocation7 + $0x130] sm:$0xf]
    %v1487 = vld [vmem:[#allocation7 + $0x134] sm:$0xff]
    %v1488 = vld [vmem:[#allocation7 + $0x13c] sm:$0xff]
    %v1489 = vld [vmem:[#allocation7 + $0x144] sm:$0xff]
    %v1490 = vld [vmem:[#allocation7 + $0x14c] sm:$0xf]
    %v1491 = vld [vmem:[#allocation7 + $0x150] sm:$0xff]
    %v1492 = vld [vmem:[#allocation7 + $0x158] sm:$0xff]
    %v1493 = vld [vmem:[#allocation7 + $0x160] sm:$0xff]
    %v1494 = vld [vmem:[#allocation7 + $0x168] sm:$0xf]
    %v1495 = vld [vmem:[#allocation7 + $0x16c] sm:$0xff]
    %v1496 = vld [vmem:[#allocation7 + $0x174] sm:$0xff]
    %v1497 = vld [vmem:[#allocation7 + $0x17c] sm:$0xff]
    %v1498 = vld [vmem:[#allocation7 + $0x184] sm:$0xf]
    %v1499 = vld [vmem:[#allocation7 + $0x188] sm:$0xff]
    %v1500 = vld [vmem:[#allocation7 + $0x190] sm:$0xff]
    %v1501 = vld [vmem:[#allocation7 + $0x198] sm:$0xff]
    %v1502 = vld [vmem:[#allocation7 + $0x1a0] sm:$0xf]
    %v1503 = vld [vmem:[#allocation7 + $0x1a4] sm:$0xff]
    %v1504 = vld [vmem:[#allocation7 + $0x1ac] sm:$0xff]
    %v1505 = vld [vmem:[#allocation7 + $0x1b4] sm:$0xff]
    %v1506 = vld [vmem:[#allocation7 + $0x1bc] sm:$0xf]
    %v1507 = vld [vmem:[#allocation7 + $0x1c0] sm:$0xff]
    %v1508 = vld [vmem:[#allocation7 + $0x1c8] sm:$0xff]
    %v1509 = vld [vmem:[#allocation7 + $0x1d0] sm:$0xff]
    %v1510 = vld [vmem:[#allocation7 + $0x1d8] sm:$0xf]
    %v1511 = vld [vmem:[#allocation7 + $0x1dc] sm:$0xff]
    %v1512 = vld [vmem:[#allocation7 + $0x1e4] sm:$0xff]
    %v1513 = vld [vmem:[#allocation7 + $0x1ec] sm:$0xff]
    %v1514 = vld [vmem:[#allocation7 + $0x1f4] sm:$0xf]
    %v1515 = vld [vmem:[#allocation7 + $0x1f8] sm:$0xff]
    %v1516 = vld [vmem:[#allocation7 + $0x200] sm:$0xff]
    %v1517 = vld [vmem:[#allocation7 + $0x208] sm:$0xff]
    %v1518 = vld [vmem:[#allocation7 + $0x210] sm:$0xf]
    %v1519 = vld [vmem:[#allocation7 + $0x214] sm:$0xff]
    %v1520 = vld [vmem:[#allocation7 + $0x21c] sm:$0xff]
    %v1521 = vld [vmem:[#allocation7 + $0x224] sm:$0xff]
    %v1522 = vld [vmem:[#allocation7 + $0x22c] sm:$0xf]
    %v1523 = vld [vmem:[#allocation7 + $0x230] sm:$0xff]
    %v1524 = vld [vmem:[#allocation7 + $0x238] sm:$0xff]
    %v1525 = vld [vmem:[#allocation7 + $0x240] sm:$0xff]
    %v1526 = vld [vmem:[#allocation7 + $0x248] sm:$0xf]
    %v1527 = vld [vmem:[#allocation7 + $0x24c] sm:$0xff]
    %v1528 = vld [vmem:[#allocation7 + $0x254] sm:$0xff]
    %v1529 = vld [vmem:[#allocation7 + $0x25c] sm:$0xff]
    %v1530 = vld [vmem:[#allocation7 + $0x264] sm:$0xf]
    %v1531 = vld [vmem:[#allocation7 + $0x268] sm:$0xff]
    %v1532 = vld [vmem:[#allocation7 + $0x270] sm:$0xff]
    %v1533 = vld [vmem:[#allocation7 + $0x278] sm:$0xff]
    %v1534 = vld [vmem:[#allocation7 + $0x280] sm:$0xf]
    %v1535 = vld [vmem:[#allocation7 + $0x284] sm:$0xff]
    %v1536 = vld [vmem:[#allocation7 + $0x28c] sm:$0xff]
    %v1537 = vld [vmem:[#allocation7 + $0x294] sm:$0xff]
    %v1538 = vld [vmem:[#allocation7 + $0x29c] sm:$0xf]
    %v1539 = vld [vmem:[#allocation7 + $0x2a0] sm:$0xff]
    %v1540 = vld [vmem:[#allocation7 + $0x2a8] sm:$0xff]
    %v1541 = vld [vmem:[#allocation7 + $0x2b0] sm:$0xff]
    %v1542 = vld [vmem:[#allocation7 + $0x2b8] sm:$0xf]
    %v1543 = vld [vmem:[#allocation7 + $0x2bc] sm:$0xff]
    %v1544 = vld [vmem:[#allocation7 + $0x2c4] sm:$0xff]
    %v1545 = vld [vmem:[#allocation7 + $0x2cc] sm:$0xff]
    %v1546 = vld [vmem:[#allocation7 + $0x2d4] sm:$0xf]
    %v1547 = vld [vmem:[#allocation7 + $0x2d8] sm:$0xff]
    %v1548 = vld [vmem:[#allocation7 + $0x2e0] sm:$0xff]
    %v1549 = vld [vmem:[#allocation7 + $0x2e8] sm:$0xff]
    %v1550 = vld [vmem:[#allocation7 + $0x2f0] sm:$0xf]
    %v1551 = vld [vmem:[#allocation7 + $0x2f4] sm:$0xff]
    %v1552 = vld [vmem:[#allocation7 + $0x2fc] sm:$0xff]
    %v1553 = vld [vmem:[#allocation7 + $0x304] sm:$0xff]
    %v1554 = vld [vmem:[#allocation7 + $0x30c] sm:$0xf]
    %v1555 = vld [vmem:[#allocation7 + $0x310] sm:$0xff]
    %v1556 = vld [vmem:[#allocation7 + $0x318] sm:$0xff]
    %v1557 = vld [vmem:[#allocation7 + $0x320] sm:$0xff]
    %v1558 = vld [vmem:[#allocation7 + $0x328] sm:$0xf]
    %v1559 = vld [vmem:[#allocation7 + $0x32c] sm:$0xff]
    %v1560 = vld [vmem:[#allocation7 + $0x334] sm:$0xff]
    %v1561 = vld [vmem:[#allocation7 + $0x33c] sm:$0xff]
    %v1562 = vld [vmem:[#allocation7 + $0x344] sm:$0xf]
    %v1563 = vld [vmem:[#allocation7 + $0x348] sm:$0xff]
    %v1564 = vld [vmem:[#allocation7 + $0x350] sm:$0xff]
    %v1565 = vld [vmem:[#allocation7 + $0x358] sm:$0xff]
    %v1566 = vld [vmem:[#allocation7 + $0x360] sm:$0xf]
    %v1567 = vld [vmem:[#allocation7 + $0x364] sm:$0xff]
    %v1568 = vld [vmem:[#allocation7 + $0x36c] sm:$0xff]
    %v1569 = vld [vmem:[#allocation7 + $0x374] sm:$0xff]
    %v1570 = vld [vmem:[#allocation7 + $0x37c] sm:$0xf]
    %v1571 = vld [vmem:[%s12] sm:$0xff]
    %v1573 = vperm.slane %v1571, 0
    %v1574 = vperm.slane %v1571, 1
    %v1575 = vperm.slane %v1571, 2
    %v1576 = vperm.slane %v1571, 3
    %v1577 = vperm.slane %v1571, 4
    %v1578 = vperm.slane %v1571, 5
    %v1579 = vperm.slane %v1571, 6
    %v1715 = vunpack.c.l.b16 %v1443
    %v1716 = vunpack.c.h.b16 %v1443
    %v1717 = vunpack.c.l.b16 %v1444
    %v1718 = vunpack.c.h.b16 %v1444
    %v1719 = vunpack.c.l.b16 %v1445
    %v1720 = vunpack.c.h.b16 %v1445
    %v1721 = vunpack.c.l.b16 %v1446
    %v1722 = vunpack.c.l.b16 %v1447
    %v1723 = vunpack.c.h.b16 %v1447
    %v1724 = vunpack.c.l.b16 %v1448
    %v1725 = vunpack.c.h.b16 %v1448
    %v1726 = vunpack.c.l.b16 %v1449
    %v1727 = vunpack.c.h.b16 %v1449
    %v1728 = vunpack.c.l.b16 %v1450
    %v1729 = vunpack.c.l.b16 %v1451
    %v1730 = vunpack.c.h.b16 %v1451
    %v1731 = vunpack.c.l.b16 %v1452
    %v1732 = vunpack.c.h.b16 %v1452
    %v1733 = vunpack.c.l.b16 %v1453
    %v1734 = vunpack.c.h.b16 %v1453
    %v1735 = vunpack.c.l.b16 %v1454
    %v1736 = vunpack.c.l.b16 %v1455
    %v1737 = vunpack.c.h.b16 %v1455
    %v1738 = vunpack.c.l.b16 %v1456
    %v1739 = vunpack.c.h.b16 %v1456
    %v1740 = vunpack.c.l.b16 %v1457
    %v1741 = vunpack.c.h.b16 %v1457
    %v1742 = vunpack.c.l.b16 %v1458
    %v1743 = vunpack.c.l.b16 %v1459
    %v1744 = vunpack.c.h.b16 %v1459
    %v1745 = vunpack.c.l.b16 %v1460
    %v1746 = vunpack.c.h.b16 %v1460
    %v1747 = vunpack.c.l.b16 %v1461
    %v1748 = vunpack.c.h.b16 %v1461
    %v1749 = vunpack.c.l.b16 %v1462
    %v1750 = vunpack.c.l.b16 %v1463
    %v1751 = vunpack.c.h.b16 %v1463
    %v1752 = vunpack.c.l.b16 %v1464
    %v1753 = vunpack.c.h.b16 %v1464
    %v1754 = vunpack.c.l.b16 %v1465
    %v1755 = vunpack.c.h.b16 %v1465
    %v1756 = vunpack.c.l.b16 %v1466
    %v1757 = vunpack.c.l.b16 %v1467
    %v1758 = vunpack.c.h.b16 %v1467
    %v1759 = vunpack.c.l.b16 %v1468
    %v1760 = vunpack.c.h.b16 %v1468
    %v1761 = vunpack.c.l.b16 %v1469
    %v1762 = vunpack.c.h.b16 %v1469
    %v1763 = vunpack.c.l.b16 %v1470
    %v1764 = vunpack.c.l.b16 %v1471
    %v1765 = vunpack.c.h.b16 %v1471
    %v1766 = vunpack.c.l.b16 %v1472
    %v1767 = vunpack.c.h.b16 %v1472
    %v1768 = vunpack.c.l.b16 %v1473
    %v1769 = vunpack.c.h.b16 %v1473
    %v1770 = vunpack.c.l.b16 %v1474
    %v1771 = vunpack.c.l.b16 %v1475
    %v1772 = vunpack.c.h.b16 %v1475
    %v1773 = vunpack.c.l.b16 %v1476
    %v1774 = vunpack.c.h.b16 %v1476
    %v1775 = vunpack.c.l.b16 %v1477
    %v1776 = vunpack.c.h.b16 %v1477
    %v1777 = vunpack.c.l.b16 %v1478
    %v1778 = vunpack.c.l.b16 %v1479
    %v1779 = vunpack.c.h.b16 %v1479
    %v1780 = vunpack.c.l.b16 %v1480
    %v1781 = vunpack.c.h.b16 %v1480
    %v1782 = vunpack.c.l.b16 %v1481
    %v1783 = vunpack.c.h.b16 %v1481
    %v1784 = vunpack.c.l.b16 %v1482
    %v1785 = vunpack.c.l.b16 %v1483
    %v1786 = vunpack.c.h.b16 %v1483
    %v1787 = vunpack.c.l.b16 %v1484
    %v1788 = vunpack.c.h.b16 %v1484
    %v1789 = vunpack.c.l.b16 %v1485
    %v1790 = vunpack.c.h.b16 %v1485
    %v1791 = vunpack.c.l.b16 %v1486
    %v1792 = vunpack.c.l.b16 %v1487
    %v1793 = vunpack.c.h.b16 %v1487
    %v1794 = vunpack.c.l.b16 %v1488
    %v1795 = vunpack.c.h.b16 %v1488
    %v1796 = vunpack.c.l.b16 %v1489
    %v1797 = vunpack.c.h.b16 %v1489
    %v1798 = vunpack.c.l.b16 %v1490
    %v1799 = vunpack.c.l.b16 %v1491
    %v1800 = vunpack.c.h.b16 %v1491
    %v1801 = vunpack.c.l.b16 %v1492
    %v1802 = vunpack.c.h.b16 %v1492
    %v1803 = vunpack.c.l.b16 %v1493
    %v1804 = vunpack.c.h.b16 %v1493
    %v1805 = vunpack.c.l.b16 %v1494
    %v1806 = vunpack.c.l.b16 %v1495
    %v1807 = vunpack.c.h.b16 %v1495
    %v1808 = vunpack.c.l.b16 %v1496
    %v1809 = vunpack.c.h.b16 %v1496
    %v1810 = vunpack.c.l.b16 %v1497
    %v1811 = vunpack.c.h.b16 %v1497
    %v1812 = vunpack.c.l.b16 %v1498
    %v1813 = vunpack.c.l.b16 %v1499
    %v1814 = vunpack.c.h.b16 %v1499
    %v1815 = vunpack.c.l.b16 %v1500
    %v1816 = vunpack.c.h.b16 %v1500
    %v1817 = vunpack.c.l.b16 %v1501
    %v1818 = vunpack.c.h.b16 %v1501
    %v1819 = vunpack.c.l.b16 %v1502
    %v1820 = vunpack.c.l.b16 %v1503
    %v1821 = vunpack.c.h.b16 %v1503
    %v1822 = vunpack.c.l.b16 %v1504
    %v1823 = vunpack.c.h.b16 %v1504
    %v1824 = vunpack.c.l.b16 %v1505
    %v1825 = vunpack.c.h.b16 %v1505
    %v1826 = vunpack.c.l.b16 %v1506
    %v1827 = vunpack.c.l.b16 %v1507
    %v1828 = vunpack.c.h.b16 %v1507
    %v1829 = vunpack.c.l.b16 %v1508
    %v1830 = vunpack.c.h.b16 %v1508
    %v1831 = vunpack.c.l.b16 %v1509
    %v1832 = vunpack.c.h.b16 %v1509
    %v1833 = vunpack.c.l.b16 %v1510
    %v1834 = vunpack.c.l.b16 %v1511
    %v1835 = vunpack.c.h.b16 %v1511
    %v1836 = vunpack.c.l.b16 %v1512
    %v1837 = vunpack.c.h.b16 %v1512
    %v1838 = vunpack.c.l.b16 %v1513
    %v1839 = vunpack.c.h.b16 %v1513
    %v1840 = vunpack.c.l.b16 %v1514
    %v1841 = vunpack.c.l.b16 %v1515
    %v1842 = vunpack.c.h.b16 %v1515
    %v1843 = vunpack.c.l.b16 %v1516
    %v1844 = vunpack.c.h.b16 %v1516
    %v1845 = vunpack.c.l.b16 %v1517
    %v1846 = vunpack.c.h.b16 %v1517
    %v1847 = vunpack.c.l.b16 %v1518
    %v1848 = vunpack.c.l.b16 %v1519
    %v1849 = vunpack.c.h.b16 %v1519
    %v1850 = vunpack.c.l.b16 %v1520
    %v1851 = vunpack.c.h.b16 %v1520
    %v1852 = vunpack.c.l.b16 %v1521
    %v1853 = vunpack.c.h.b16 %v1521
    %v1854 = vunpack.c.l.b16 %v1522
    %v1855 = vunpack.c.l.b16 %v1523
    %v1856 = vunpack.c.h.b16 %v1523
    %v1857 = vunpack.c.l.b16 %v1524
    %v1858 = vunpack.c.h.b16 %v1524
    %v1859 = vunpack.c.l.b16 %v1525
    %v1860 = vunpack.c.h.b16 %v1525
    %v1861 = vunpack.c.l.b16 %v1526
    %v1862 = vunpack.c.l.b16 %v1527
    %v1863 = vunpack.c.h.b16 %v1527
    %v1864 = vunpack.c.l.b16 %v1528
    %v1865 = vunpack.c.h.b16 %v1528
    %v1866 = vunpack.c.l.b16 %v1529
    %v1867 = vunpack.c.h.b16 %v1529
    %v1868 = vunpack.c.l.b16 %v1530
    %v1869 = vunpack.c.l.b16 %v1531
    %v1870 = vunpack.c.h.b16 %v1531
    %v1871 = vunpack.c.l.b16 %v1532
    %v1872 = vunpack.c.h.b16 %v1532
    %v1873 = vunpack.c.l.b16 %v1533
    %v1874 = vunpack.c.h.b16 %v1533
    %v1875 = vunpack.c.l.b16 %v1534
    %v1876 = vunpack.c.l.b16 %v1535
    %v1877 = vunpack.c.h.b16 %v1535
    %v1878 = vunpack.c.l.b16 %v1536
    %v1879 = vunpack.c.h.b16 %v1536
    %v1880 = vunpack.c.l.b16 %v1537
    %v1881 = vunpack.c.h.b16 %v1537
    %v1882 = vunpack.c.l.b16 %v1538
    %v1883 = vunpack.c.l.b16 %v1539
    %v1884 = vunpack.c.h.b16 %v1539
    %v1885 = vunpack.c.l.b16 %v1540
    %v1886 = vunpack.c.h.b16 %v1540
    %v1887 = vunpack.c.l.b16 %v1541
    %v1888 = vunpack.c.h.b16 %v1541
    %v1889 = vunpack.c.l.b16 %v1542
    %v1890 = vunpack.c.l.b16 %v1543
    %v1891 = vunpack.c.h.b16 %v1543
    %v1892 = vunpack.c.l.b16 %v1544
    %v1893 = vunpack.c.h.b16 %v1544
    %v1894 = vunpack.c.l.b16 %v1545
    %v1895 = vunpack.c.h.b16 %v1545
    %v1896 = vunpack.c.l.b16 %v1546
    %v1897 = vunpack.c.l.b16 %v1547
    %v1898 = vunpack.c.h.b16 %v1547
    %v1899 = vunpack.c.l.b16 %v1548
    %v1900 = vunpack.c.h.b16 %v1548
    %v1901 = vunpack.c.l.b16 %v1549
    %v1902 = vunpack.c.h.b16 %v1549
    %v1903 = vunpack.c.l.b16 %v1550
    %v1904 = vunpack.c.l.b16 %v1551
    %v1905 = vunpack.c.h.b16 %v1551
    %v1906 = vunpack.c.l.b16 %v1552
    %v1907 = vunpack.c.h.b16 %v1552
    %v1908 = vunpack.c.l.b16 %v1553
    %v1909 = vunpack.c.h.b16 %v1553
    %v1910 = vunpack.c.l.b16 %v1554
    %v1911 = vunpack.c.l.b16 %v1555
    %v1912 = vunpack.c.h.b16 %v1555
    %v1913 = vunpack.c.l.b16 %v1556
    %v1914 = vunpack.c.h.b16 %v1556
    %v1915 = vunpack.c.l.b16 %v1557
    %v1916 = vunpack.c.h.b16 %v1557
    %v1917 = vunpack.c.l.b16 %v1558
    %v1918 = vunpack.c.l.b16 %v1559
    %v1919 = vunpack.c.h.b16 %v1559
    %v1920 = vunpack.c.l.b16 %v1560
    %v1921 = vunpack.c.h.b16 %v1560
    %v1922 = vunpack.c.l.b16 %v1561
    %v1923 = vunpack.c.h.b16 %v1561
    %v1924 = vunpack.c.l.b16 %v1562
    %v1925 = vunpack.c.l.b16 %v1563
    %v1926 = vunpack.c.h.b16 %v1563
    %v1927 = vunpack.c.l.b16 %v1564
    %v1928 = vunpack.c.h.b16 %v1564
    %v1929 = vunpack.c.l.b16 %v1565
    %v1930 = vunpack.c.h.b16 %v1565
    %v1931 = vunpack.c.l.b16 %v1566
    %v1932 = vunpack.c.l.b16 %v1567
    %v1933 = vunpack.c.h.b16 %v1567
    %v1934 = vunpack.c.l.b16 %v1568
    %v1935 = vunpack.c.h.b16 %v1568
    %v1936 = vunpack.c.l.b16 %v1569
    %v1937 = vunpack.c.h.b16 %v1569
    %v1938 = vunpack.c.l.b16 %v1570
    %v1939 = vpack.c.b16 %v1722, %v1715
    %v1940 = vpack.c.b16 %v1723, %v1716
    %v1941 = vpack.c.b16 %v1724, %v1717
    %v1942 = vpack.c.b16 %v1725, %v1718
    %v1943 = vpack.c.b16 %v1726, %v1719
    %v1944 = vpack.c.b16 %v1727, %v1720
    %v1945 = vpack.c.b16 %v1728, %v1721
    %v1946 = vpack.c.b16 %v1736, %v1729
    %v1947 = vpack.c.b16 %v1737, %v1730
    %v1948 = vpack.c.b16 %v1738, %v1731
    %v1949 = vpack.c.b16 %v1739, %v1732
    %v1950 = vpack.c.b16 %v1740, %v1733
    %v1951 = vpack.c.b16 %v1741, %v1734
    %v1952 = vpack.c.b16 %v1742, %v1735
    %v1953 = vpack.c.b16 %v1750, %v1743
    %v1954 = vpack.c.b16 %v1751, %v1744
    %v1955 = vpack.c.b16 %v1752, %v1745
    %v1956 = vpack.c.b16 %v1753, %v1746
    %v1957 = vpack.c.b16 %v1754, %v1747
    %v1958 = vpack.c.b16 %v1755, %v1748
    %v1959 = vpack.c.b16 %v1756, %v1749
    %v1960 = vpack.c.b16 %v1764, %v1757
    %v1961 = vpack.c.b16 %v1765, %v1758
    %v1962 = vpack.c.b16 %v1766, %v1759
    %v1963 = vpack.c.b16 %v1767, %v1760
    %v1964 = vpack.c.b16 %v1768, %v1761
    %v1965 = vpack.c.b16 %v1769, %v1762
    %v1966 = vpack.c.b16 %v1770, %v1763
    %v1967 = vpack.c.b16 %v1778, %v1771
    %v1968 = vpack.c.b16 %v1779, %v1772
    %v1969 = vpack.c.b16 %v1780, %v1773
    %v1970 = vpack.c.b16 %v1781, %v1774
    %v1971 = vpack.c.b16 %v1782, %v1775
    %v1972 = vpack.c.b16 %v1783, %v1776
    %v1973 = vpack.c.b16 %v1784, %v1777
    %v1974 = vpack.c.b16 %v1792, %v1785
    %v1975 = vpack.c.b16 %v1793, %v1786
    %v1976 = vpack.c.b16 %v1794, %v1787
    %v1977 = vpack.c.b16 %v1795, %v1788
    %v1978 = vpack.c.b16 %v1796, %v1789
    %v1979 = vpack.c.b16 %v1797, %v1790
    %v1980 = vpack.c.b16 %v1798, %v1791
    %v1981 = vpack.c.b16 %v1806, %v1799
    %v1982 = vpack.c.b16 %v1807, %v1800
    %v1983 = vpack.c.b16 %v1808, %v1801
    %v1984 = vpack.c.b16 %v1809, %v1802
    %v1985 = vpack.c.b16 %v1810, %v1803
    %v1986 = vpack.c.b16 %v1811, %v1804
    %v1987 = vpack.c.b16 %v1812, %v1805
    %v1988 = vpack.c.b16 %v1820, %v1813
    %v1989 = vpack.c.b16 %v1821, %v1814
    %v1990 = vpack.c.b16 %v1822, %v1815
    %v1991 = vpack.c.b16 %v1823, %v1816
    %v1992 = vpack.c.b16 %v1824, %v1817
    %v1993 = vpack.c.b16 %v1825, %v1818
    %v1994 = vpack.c.b16 %v1826, %v1819
    %v1995 = vpack.c.b16 %v1834, %v1827
    %v1996 = vpack.c.b16 %v1835, %v1828
    %v1997 = vpack.c.b16 %v1836, %v1829
    %v1998 = vpack.c.b16 %v1837, %v1830
    %v1999 = vpack.c.b16 %v1838, %v1831
    %v2000 = vpack.c.b16 %v1839, %v1832
    %v2001 = vpack.c.b16 %v1840, %v1833
    %v2002 = vpack.c.b16 %v1848, %v1841
    %v2003 = vpack.c.b16 %v1849, %v1842
    %v2004 = vpack.c.b16 %v1850, %v1843
    %v2005 = vpack.c.b16 %v1851, %v1844
    %v2006 = vpack.c.b16 %v1852, %v1845
    %v2007 = vpack.c.b16 %v1853, %v1846
    %v2008 = vpack.c.b16 %v1854, %v1847
    %v2009 = vpack.c.b16 %v1862, %v1855
    %v2010 = vpack.c.b16 %v1863, %v1856
    %v2011 = vpack.c.b16 %v1864, %v1857
    %v2012 = vpack.c.b16 %v1865, %v1858
    %v2013 = vpack.c.b16 %v1866, %v1859
    %v2014 = vpack.c.b16 %v1867, %v1860
    %v2015 = vpack.c.b16 %v1868, %v1861
    %v2016 = vpack.c.b16 %v1876, %v1869
    %v2017 = vpack.c.b16 %v1877, %v1870
    %v2018 = vpack.c.b16 %v1878, %v1871
    %v2019 = vpack.c.b16 %v1879, %v1872
    %v2020 = vpack.c.b16 %v1880, %v1873
    %v2021 = vpack.c.b16 %v1881, %v1874
    %v2022 = vpack.c.b16 %v1882, %v1875
    %v2023 = vpack.c.b16 %v1890, %v1883
    %v2024 = vpack.c.b16 %v1891, %v1884
    %v2025 = vpack.c.b16 %v1892, %v1885
    %v2026 = vpack.c.b16 %v1893, %v1886
    %v2027 = vpack.c.b16 %v1894, %v1887
    %v2028 = vpack.c.b16 %v1895, %v1888
    %v2029 = vpack.c.b16 %v1896, %v1889
    %v2030 = vpack.c.b16 %v1904, %v1897
    %v2031 = vpack.c.b16 %v1905, %v1898
    %v2032 = vpack.c.b16 %v1906, %v1899
    %v2033 = vpack.c.b16 %v1907, %v1900
    %v2034 = vpack.c.b16 %v1908, %v1901
    %v2035 = vpack.c.b16 %v1909, %v1902
    %v2036 = vpack.c.b16 %v1910, %v1903
    %v2037 = vpack.c.b16 %v1918, %v1911
    %v2038 = vpack.c.b16 %v1919, %v1912
    %v2039 = vpack.c.b16 %v1920, %v1913
    %v2040 = vpack.c.b16 %v1921, %v1914
    %v2041 = vpack.c.b16 %v1922, %v1915
    %v2042 = vpack.c.b16 %v1923, %v1916
    %v2043 = vpack.c.b16 %v1924, %v1917
    %v2044 = vpack.c.b16 %v1932, %v1925
    %v2045 = vpack.c.b16 %v1933, %v1926
    %v2046 = vpack.c.b16 %v1934, %v1927
    %v2047 = vpack.c.b16 %v1935, %v1928
    %v2048 = vpack.c.b16 %v1936, %v1929
    %v2049 = vpack.c.b16 %v1937, %v1930
    %v2050 = vpack.c.b16 %v1938, %v1931
    %2163 = vmatpush.bf16.msra.mxu0 %v1988
    %2164 = vmatpush.bf16.msra.mxu0 %v1981
    %2165 = vmatpush.bf16.msra.mxu0 %v1974
    %2166 = vmatpush.bf16.msra.mxu0 %v1967
    %2167 = vmatpush.bf16.msra.mxu0 %v1960
    %2168 = vmatpush.bf16.msra.mxu0 %v1953
    %2169 = vmatpush.bf16.msra.mxu0 %v1946
    %2170 = vmatpush.bf16.msra.mxu0 %v1939
    %2171 = vmatmul.bf16.gmra.mxu0 %v1441
    %v2172 = vpop.f32.mrf.mxu0
    %v2173 = vadd.f32 %v1573, %v2172
    %v2174 = vpop.f32.mrf.mxu0
    %2175 = vdwg.mxu0
    %2176 = vmatpush.bf16.msra.mxu0 %v2044
    %2177 = vmatpush.bf16.msra.mxu0 %v2037
    %2178 = vmatpush.bf16.msra.mxu0 %v2030
    %2179 = vmatpush.bf16.msra.mxu0 %v2023
    %2180 = vmatpush.bf16.msra.mxu0 %v2016
    %2181 = vmatpush.bf16.msra.mxu0 %v2009
    %2182 = vmatpush.bf16.msra.mxu0 %v2002
    %2183 = vmatpush.bf16.msra.mxu0 %v1995
    %2184 = vmatmul.bf16.gmra.mxu0 %v1442
    %v2185 = vpop.f32.mrf.mxu0
    %v2186 = vadd.f32 %v2173, %v2185
    %v2187 = vpop.f32.mrf.mxu0
    %2188 = vdwg.mxu0
    %2189 = vmatpush.bf16.msra.mxu0 %v1989
    %2190 = vmatpush.bf16.msra.mxu0 %v1982
    %2191 = vmatpush.bf16.msra.mxu0 %v1975
    %2192 = vmatpush.bf16.msra.mxu0 %v1968
    %2193 = vmatpush.bf16.msra.mxu0 %v1961
    %2194 = vmatpush.bf16.msra.mxu0 %v1954
    %2195 = vmatpush.bf16.msra.mxu0 %v1947
    %2196 = vmatpush.bf16.msra.mxu0 %v1940
    %2197 = vmatmul.bf16.gmra.mxu0 %v1441
    %v2198 = vpop.f32.mrf.mxu0
    %v2199 = vadd.f32 %v1574, %v2198
    %v2200 = vpop.f32.mrf.mxu0
    %2201 = vdwg.mxu0
    %2202 = vmatpush.bf16.msra.mxu0 %v2045
    %2203 = vmatpush.bf16.msra.mxu0 %v2038
    %2204 = vmatpush.bf16.msra.mxu0 %v2031
    %2205 = vmatpush.bf16.msra.mxu0 %v2024
    %2206 = vmatpush.bf16.msra.mxu0 %v2017
    %2207 = vmatpush.bf16.msra.mxu0 %v2010
    %2208 = vmatpush.bf16.msra.mxu0 %v2003
    %2209 = vmatpush.bf16.msra.mxu0 %v1996
    %2210 = vmatmul.bf16.gmra.mxu0 %v1442
    %v2211 = vpop.f32.mrf.mxu0
    %v2212 = vadd.f32 %v2199, %v2211
    %v2213 = vpop.f32.mrf.mxu0
    %2214 = vdwg.mxu0
    %2215 = vmatpush.bf16.msra.mxu0 %v1990
    %2216 = vmatpush.bf16.msra.mxu0 %v1983
    %2217 = vmatpush.bf16.msra.mxu0 %v1976
    %2218 = vmatpush.bf16.msra.mxu0 %v1969
    %2219 = vmatpush.bf16.msra.mxu0 %v1962
    %2220 = vmatpush.bf16.msra.mxu0 %v1955
    %2221 = vmatpush.bf16.msra.mxu0 %v1948
    %2222 = vmatpush.bf16.msra.mxu0 %v1941
    %2223 = vmatmul.bf16.gmra.mxu0 %v1441
    %v2224 = vpop.f32.mrf.mxu0
    %v2225 = vadd.f32 %v1575, %v2224
    %v2226 = vpop.f32.mrf.mxu0
    %2227 = vdwg.mxu0
    %2228 = vmatpush.bf16.msra.mxu0 %v2046
    %2229 = vmatpush.bf16.msra.mxu0 %v2039
    %2230 = vmatpush.bf16.msra.mxu0 %v2032
    %2231 = vmatpush.bf16.msra.mxu0 %v2025
    %2232 = vmatpush.bf16.msra.mxu0 %v2018
    %2233 = vmatpush.bf16.msra.mxu0 %v2011
    %2234 = vmatpush.bf16.msra.mxu0 %v2004
    %2235 = vmatpush.bf16.msra.mxu0 %v1997
    %2236 = vmatmul.bf16.gmra.mxu0 %v1442
    %v2237 = vpop.f32.mrf.mxu0
    %v2238 = vadd.f32 %v2225, %v2237
    %v2239 = vpop.f32.mrf.mxu0
    %2240 = vdwg.mxu0
    %2241 = vmatpush.bf16.msra.mxu0 %v1991
    %2242 = vmatpush.bf16.msra.mxu0 %v1984
    %2243 = vmatpush.bf16.msra.mxu0 %v1977
    %2244 = vmatpush.bf16.msra.mxu0 %v1970
    %2245 = vmatpush.bf16.msra.mxu0 %v1963
    %2246 = vmatpush.bf16.msra.mxu0 %v1956
    %2247 = vmatpush.bf16.msra.mxu0 %v1949
    %2248 = vmatpush.bf16.msra.mxu0 %v1942
    %2249 = vmatmul.bf16.gmra.mxu0 %v1441
    %v2250 = vpop.f32.mrf.mxu0
    %v2251 = vadd.f32 %v1576, %v2250
    %v2252 = vpop.f32.mrf.mxu0
    %2253 = vdwg.mxu0
    %2254 = vmatpush.bf16.msra.mxu0 %v2047
    %2255 = vmatpush.bf16.msra.mxu0 %v2040
    %2256 = vmatpush.bf16.msra.mxu0 %v2033
    %2257 = vmatpush.bf16.msra.mxu0 %v2026
    %2258 = vmatpush.bf16.msra.mxu0 %v2019
    %2259 = vmatpush.bf16.msra.mxu0 %v2012
    %2260 = vmatpush.bf16.msra.mxu0 %v2005
    %2261 = vmatpush.bf16.msra.mxu0 %v1998
    %2262 = vmatmul.bf16.gmra.mxu0 %v1442
    %v2263 = vpop.f32.mrf.mxu0
    %v2264 = vadd.f32 %v2251, %v2263
    %v2265 = vpop.f32.mrf.mxu0
    %2266 = vdwg.mxu0
    %2267 = vmatpush.bf16.msra.mxu0 %v1992
    %2268 = vmatpush.bf16.msra.mxu0 %v1985
    %2269 = vmatpush.bf16.msra.mxu0 %v1978
    %2270 = vmatpush.bf16.msra.mxu0 %v1971
    %2271 = vmatpush.bf16.msra.mxu0 %v1964
    %2272 = vmatpush.bf16.msra.mxu0 %v1957
    %2273 = vmatpush.bf16.msra.mxu0 %v1950
    %2274 = vmatpush.bf16.msra.mxu0 %v1943
    %2275 = vmatmul.bf16.gmra.mxu0 %v1441
    %v2276 = vpop.f32.mrf.mxu0
    %v2277 = vadd.f32 %v1577, %v2276
    %v2278 = vpop.f32.mrf.mxu0
    %2279 = vdwg.mxu0
    %2280 = vmatpush.bf16.msra.mxu0 %v2048
    %2281 = vmatpush.bf16.msra.mxu0 %v2041
    %2282 = vmatpush.bf16.msra.mxu0 %v2034
    %2283 = vmatpush.bf16.msra.mxu0 %v2027
    %2284 = vmatpush.bf16.msra.mxu0 %v2020
    %2285 = vmatpush.bf16.msra.mxu0 %v2013
    %2286 = vmatpush.bf16.msra.mxu0 %v2006
    %2287 = vmatpush.bf16.msra.mxu0 %v1999
    %2288 = vmatmul.bf16.gmra.mxu0 %v1442
    %v2289 = vpop.f32.mrf.mxu0
    %v2290 = vadd.f32 %v2277, %v2289
    %v2291 = vpop.f32.mrf.mxu0
    %2292 = vdwg.mxu0
    %2293 = vmatpush.bf16.msra.mxu0 %v1993
    %2294 = vmatpush.bf16.msra.mxu0 %v1986
    %2295 = vmatpush.bf16.msra.mxu0 %v1979
    %2296 = vmatpush.bf16.msra.mxu0 %v1972
    %2297 = vmatpush.bf16.msra.mxu0 %v1965
    %2298 = vmatpush.bf16.msra.mxu0 %v1958
    %2299 = vmatpush.bf16.msra.mxu0 %v1951
    %2300 = vmatpush.bf16.msra.mxu0 %v1944
    %2301 = vmatmul.bf16.gmra.mxu0 %v1441
    %v2302 = vpop.f32.mrf.mxu0
    %v2303 = vadd.f32 %v1578, %v2302
    %v2304 = vpop.f32.mrf.mxu0
    %2305 = vdwg.mxu0
    %2306 = vmatpush.bf16.msra.mxu0 %v2049
    %2307 = vmatpush.bf16.msra.mxu0 %v2042
    %2308 = vmatpush.bf16.msra.mxu0 %v2035
    %2309 = vmatpush.bf16.msra.mxu0 %v2028
    %2310 = vmatpush.bf16.msra.mxu0 %v2021
    %2311 = vmatpush.bf16.msra.mxu0 %v2014
    %2312 = vmatpush.bf16.msra.mxu0 %v2007
    %2313 = vmatpush.bf16.msra.mxu0 %v2000
    %2314 = vmatmul.bf16.gmra.mxu0 %v1442
    %v2315 = vpop.f32.mrf.mxu0
    %v2316 = vadd.f32 %v2303, %v2315
    %v2317 = vpop.f32.mrf.mxu0
    %2318 = vdwg.mxu0
    %2319 = vmatpush.bf16.msra.mxu0 %v1994
    %2320 = vmatpush.bf16.msra.mxu0 %v1987
    %2321 = vmatpush.bf16.msra.mxu0 %v1980
    %2322 = vmatpush.bf16.msra.mxu0 %v1973
    %2323 = vmatpush.bf16.msra.mxu0 %v1966
    %2324 = vmatpush.bf16.msra.mxu0 %v1959
    %2325 = vmatpush.bf16.msra.mxu0 %v1952
    %2326 = vmatpush.bf16.msra.mxu0 %v1945
    %2327 = vmatmul.bf16.gmra.mxu0 %v1441
    %v2328 = vpop.f32.mrf.mxu0
    %v2329 = vadd.f32 %v1579, %v2328
    %v2330 = vpop.f32.mrf.mxu0
    %2331 = vdwg.mxu0
    %2332 = vmatpush.bf16.msra.mxu0 %v2050
    %2333 = vmatpush.bf16.msra.mxu0 %v2043
    %2334 = vmatpush.bf16.msra.mxu0 %v2036
    %2335 = vmatpush.bf16.msra.mxu0 %v2029
    %2336 = vmatpush.bf16.msra.mxu0 %v2022
    %2337 = vmatpush.bf16.msra.mxu0 %v2015
    %2338 = vmatpush.bf16.msra.mxu0 %v2008
    %2339 = vmatpush.bf16.msra.mxu0 %v2001
    %2340 = vmatmul.bf16.gmra.mxu0 %v1442
    %v2341 = vpop.f32.mrf.mxu0
    %v2342 = vadd.f32 %v2329, %v2341
    %v2343 = vpop.f32.mrf.mxu0
    %2344 = vdwg.mxu0
    %v2345 = vxor.u32 %v2186, 2147483648
    %v2346 = vxor.u32 %v2212, 2147483648
    %v2347 = vxor.u32 %v2238, 2147483648
    %v2348 = vxor.u32 %v2264, 2147483648
    %v2349 = vxor.u32 %v2290, 2147483648
    %v2350 = vxor.u32 %v2316, 2147483648
    %v2351 = vxor.u32 %v2342, 2147483648
    %v2352 = vmul.f32 %v2345, 1.442695
    %v2353 = vpow.pop %v2352
    %v2354 = vmul.f32 %v2346, 1.442695
    %v2355 = vpow.pop %v2354
    %v2356 = vmul.f32 %v2347, 1.442695
    %v2357 = vpow.pop %v2356
    %v2358 = vmul.f32 %v2348, 1.442695
    %v2359 = vpow.pop %v2358
    %v2360 = vmul.f32 %v2349, 1.442695
    %v2361 = vpow.pop %v2360
    %v2362 = vmul.f32 %v2350, 1.442695
    %v2363 = vpow.pop %v2362
    %v2364 = vmul.f32 %v2351, 1.442695
    %v2365 = vpow.pop %v2364
    %v2366 = vadd.f32 %v2353, 1.0
    %v2367 = vadd.f32 %v2355, 1.0
    %v2368 = vadd.f32 %v2357, 1.0
    %v2369 = vadd.f32 %v2359, 1.0
    %v2370 = vadd.f32 %v2361, 1.0
    %v2371 = vadd.f32 %v2363, 1.0
    %v2372 = vadd.f32 %v2365, 1.0
    %v2373 = vrcp.pop %v2366
    %v2374 = vmul.f32 %v2366, %v2373
    %v2375 = vsub.f32 1.0, %v2374
    %v2376 = vmul.f32 %v2373, %v2375
    %v2377 = vadd.f32 %v2373, %v2376
    %vm2378 = vweird.f32 %v2366
    %vm2379 = vweird.f32 %v2373
    %vm2380 = vmor %vm2378, %vm2379
    %v2381 = vsel %vm2380, %v2373, %v2377
    %v2382 = vand.u32 2147483647, %v2366
    %vm2383 = vcmp.eq.f32.partialorder %v2382, 8.507059e+37
    %v2384 = vand.u32 %v2366, 2147483648
    %v2385 = vor.u32 1.1754944e-38, %v2384
    %v2386 = vsel %vm2383, %v2385, %v2381
    %v2387 = vmul.f32 1.0, %v2386
    %v2388 = vrcp.pop %v2367
    %v2389 = vmul.f32 %v2367, %v2388
    %v2390 = vsub.f32 1.0, %v2389
    %v2391 = vmul.f32 %v2388, %v2390
    %v2392 = vadd.f32 %v2388, %v2391
    %vm2393 = vweird.f32 %v2367
    %vm2394 = vweird.f32 %v2388
    %vm2395 = vmor %vm2393, %vm2394
    %v2396 = vsel %vm2395, %v2388, %v2392
    %v2397 = vand.u32 2147483647, %v2367
    %vm2398 = vcmp.eq.f32.partialorder %v2397, 8.507059e+37
    %v2399 = vand.u32 %v2367, 2147483648
    %v2400 = vor.u32 1.1754944e-38, %v2399
    %v2401 = vsel %vm2398, %v2400, %v2396
    %v2402 = vmul.f32 1.0, %v2401
    %v2403 = vrcp.pop %v2368
    %v2404 = vmul.f32 %v2368, %v2403
    %v2405 = vsub.f32 1.0, %v2404
    %v2406 = vmul.f32 %v2403, %v2405
    %v2407 = vadd.f32 %v2403, %v2406
    %vm2408 = vweird.f32 %v2368
    %vm2409 = vweird.f32 %v2403
    %vm2410 = vmor %vm2408, %vm2409
    %v2411 = vsel %vm2410, %v2403, %v2407
    %v2412 = vand.u32 2147483647, %v2368
    %vm2413 = vcmp.eq.f32.partialorder %v2412, 8.507059e+37
    %v2414 = vand.u32 %v2368, 2147483648
    %v2415 = vor.u32 1.1754944e-38, %v2414
    %v2416 = vsel %vm2413, %v2415, %v2411
    %v2417 = vmul.f32 1.0, %v2416
    %v2418 = vrcp.pop %v2369
    %v2419 = vmul.f32 %v2369, %v2418
    %v2420 = vsub.f32 1.0, %v2419
    %v2421 = vmul.f32 %v2418, %v2420
    %v2422 = vadd.f32 %v2418, %v2421
    %vm2423 = vweird.f32 %v2369
    %vm2424 = vweird.f32 %v2418
    %vm2425 = vmor %vm2423, %vm2424
    %v2426 = vsel %vm2425, %v2418, %v2422
    %v2427 = vand.u32 2147483647, %v2369
    %vm2428 = vcmp.eq.f32.partialorder %v2427, 8.507059e+37
    %v2429 = vand.u32 %v2369, 2147483648
    %v2430 = vor.u32 1.1754944e-38, %v2429
    %v2431 = vsel %vm2428, %v2430, %v2426
    %v2432 = vmul.f32 1.0, %v2431
    %v2433 = vrcp.pop %v2370
    %v2434 = vmul.f32 %v2370, %v2433
    %v2435 = vsub.f32 1.0, %v2434
    %v2436 = vmul.f32 %v2433, %v2435
    %v2437 = vadd.f32 %v2433, %v2436
    %vm2438 = vweird.f32 %v2370
    %vm2439 = vweird.f32 %v2433
    %vm2440 = vmor %vm2438, %vm2439
    %v2441 = vsel %vm2440, %v2433, %v2437
    %v2442 = vand.u32 2147483647, %v2370
    %vm2443 = vcmp.eq.f32.partialorder %v2442, 8.507059e+37
    %v2444 = vand.u32 %v2370, 2147483648
    %v2445 = vor.u32 1.1754944e-38, %v2444
    %v2446 = vsel %vm2443, %v2445, %v2441
    %v2447 = vmul.f32 1.0, %v2446
    %v2448 = vrcp.pop %v2371
    %v2449 = vmul.f32 %v2371, %v2448
    %v2450 = vsub.f32 1.0, %v2449
    %v2451 = vmul.f32 %v2448, %v2450
    %v2452 = vadd.f32 %v2448, %v2451
    %vm2453 = vweird.f32 %v2371
    %vm2454 = vweird.f32 %v2448
    %vm2455 = vmor %vm2453, %vm2454
    %v2456 = vsel %vm2455, %v2448, %v2452
    %v2457 = vand.u32 2147483647, %v2371
    %vm2458 = vcmp.eq.f32.partialorder %v2457, 8.507059e+37
    %v2459 = vand.u32 %v2371, 2147483648
    %v2460 = vor.u32 1.1754944e-38, %v2459
    %v2461 = vsel %vm2458, %v2460, %v2456
    %v2462 = vmul.f32 1.0, %v2461
    %v2463 = vrcp.pop %v2372
    %v2464 = vmul.f32 %v2372, %v2463
    %v2465 = vsub.f32 1.0, %v2464
    %v2466 = vmul.f32 %v2463, %v2465
    %v2467 = vadd.f32 %v2463, %v2466
    %vm2468 = vweird.f32 %v2372
    %vm2469 = vweird.f32 %v2463
    %vm2470 = vmor %vm2468, %vm2469
    %v2471 = vsel %vm2470, %v2463, %v2467
    %v2472 = vand.u32 2147483647, %v2372
    %vm2473 = vcmp.eq.f32.partialorder %v2472, 8.507059e+37
    %v2474 = vand.u32 %v2372, 2147483648
    %v2475 = vor.u32 1.1754944e-38, %v2474
    %v2476 = vsel %vm2473, %v2475, %v2471
    %v2477 = vmul.f32 1.0, %v2476
    %2478 = vst [vmem:[%s13] sm:$0xff] %v2387
    %2479 = vst [vmem:[%s13 + $0x8] sm:$0xff] %v2402
    %2480 = vst [vmem:[%s13 + $0x10] sm:$0xff] %v2417
    %2481 = vst [vmem:[%s13 + $0x18] sm:$0xff] %v2432
    %2482 = vst [vmem:[%s13 + $0x20] sm:$0xff] %v2447
    %2483 = vst [vmem:[%s13 + $0x28] sm:$0xff] %v2462
    %2484 = vst [vmem:[%s13 + $0x30] sm:$0xff] %v2477
    // Predicated region
    $region70: #{ae_forward.1} parent=1 // pred_check
      _
    $region71: #{ae_forward.1} parent=1 // pred_check_branch
      %2486 = sbr.rel (0) target = $region73
    $region72: #{ae_forward.1} parent=1 // pred_region
      _
    $region73: #{ae_forward.1} parent=1 // pred_fallthru
      _
    // Predicated region
    $region74: #{ae_forward.1} parent=1 // pred_check
      _
    $region75: #{ae_forward.1} parent=1 // pred_check_branch
      %2488 = sbr.rel (0) target = $region77
    $region76: #{ae_forward.1} parent=1 // pred_region
      _
    $region77: #{ae_forward.1} parent=1 // pred_fallthru
      _
    %2489 = vsyncpa [#allocation3], 1
    %2490 = vsyncpa [#allocation5], 1
    %2491 = vsyncpa [#allocation8], 1

</llo_original>
